<compile_context>
chip_gen: v5e
topology: v5e:2x2
jax: 0.10.0
libtpu: 0.0.40
codegen_flags: <defaults>
</compile_context>

<pallas_src>
import jax
import jax.numpy as jnp
from jax import lax
from jax.experimental import pallas as pl
from jax.experimental.pallas import tpu as pltpu


def _disparity_conv_kernel(w_ref, b_ref, x_ref, halo_ref, out_ref):
    """One (batch, H-tile) grid point.

    w_ref   : SMEM (output_nc, max_shift*9) f32 -- conv weight / C, flattened over (ci,ki,kj)
    b_ref   : SMEM (output_nc,)             f32 -- conv bias
    x_ref   : VMEM (1, C, TILE_H, W)            -- input rows of this tile
    halo_ref: VMEM (1, 1, C, 2, W)              -- row above / below the tile (zeros at border)
    out_ref : VMEM (1, output_nc, TILE_H, W)
    """
    _, c, tile_h, w = x_ref.shape
    output_nc = out_ref.shape[1]
    max_shift = w_ref.shape[1] // 9

    x_t = x_ref[0]        # (C, TILE_H, W), kept in input dtype (no full-slab f32 copy)
    hb = halo_ref[0, 0]   # (C, 2, W)

    # Column edge masks for the conv's padding=1, hoisted out of all loops.
    col_idx = lax.broadcasted_iota(jnp.int32, (tile_h, w), 1)
    col_ok_left = col_idx > 0          # tap at j-1 is zero padding when j == 0
    col_ok_right = col_idx < w - 1     # tap at j+1 is zero padding when j == W-1

    def accumulate_shift(ci, accs):
        """Add the contribution of disparity shift s = ci + 1 to every accumulator."""
        s = ci + 1
        amt = (w - s) % w  # jnp.roll(x, -s, axis=-1) == pltpu.roll(x, (w - s) % w, axis=-1)

        # L1 cost map of this shift for the tile rows and for the two halo rows.  The 1/C of
        # the channel mean is already folded into the weights (conv is linear in the map).
        d_main = jnp.sum(jnp.abs(x_t - pltpu.roll(x_t, shift=amt, axis=2)),
                         axis=0).astype(jnp.float32)                  # (TILE_H, W)
        d_halo = jnp.sum(jnp.abs(hb - pltpu.roll(hb, shift=amt, axis=2)),
                         axis=0).astype(jnp.float32)                  # (2, W)

        # Row-shifted views rows[ki][i, j] == diff[i + ki - 1, j] (halo rows at tile edges).
        r_up = jnp.concatenate([d_halo[0:1, :], d_main[:tile_h - 1, :]], axis=0)
        r_dn = jnp.concatenate([d_main[1:, :], d_halo[1:2, :]], axis=0)
        rows = (r_up, d_main, r_dn)

        # Scalar weights for this shift: SMEM reads hoisted above the vector work.
        wv = [[w_ref[o, ci * 9 + k] for k in range(9)] for o in range(output_nc)]

        accs = list(accs)
        for ki in range(3):
            r = rows[ki]
            taps = (
                jnp.where(col_ok_left, pltpu.roll(r, shift=1, axis=1), 0.0),             # j-1
                r,                                                                        # j
                jnp.where(col_ok_right, pltpu.roll(r, shift=(w - 1) % w, axis=1), 0.0),   # j+1
            )
            # TODO(synk): for large output_nc / max_shift, map this channel mix onto the MXU
            # ((TILE_H*W, 9*max_shift) tap matrix @ weights) instead of VPU FMAs.
            for kj in range(3):
                t = taps[kj]
                for o in range(output_nc):
                    accs[o] = accs[o] + wv[o][ki * 3 + kj] * t
        return tuple(accs)

    # One f32 (TILE_H, W) accumulator per output channel, started at the bias.
    accs = tuple(jnp.full((tile_h, w), b_ref[o], jnp.float32) for o in range(output_nc))
    if max_shift <= 8:
        # Short loop: Python-unroll so the scheduler sees one straight-line block.
        for ci in range(max_shift):
            accs = accumulate_shift(ci, accs)
    else:
        # Large max_shift: in-kernel loop bounds live ranges and compile time.
        accs = lax.fori_loop(0, max_shift, accumulate_shift, accs)

    for o in range(output_nc):
        out_ref[0, o] = accs[o].astype(out_ref.dtype)


def _pick_tile_h(h):
    for cand in (256, 128, 64, 32, 16, 8):
        if h % cand == 0:
            return cand
    return h


def disparity_conv(x, weight, bias, *, max_shift, output_nc, tile_h=None):
    """x: (B, C, H, W); weight: (output_nc, max_shift, 3, 3); bias: (output_nc,)."""
    b, c, h, w = x.shape
    assert weight.shape == (output_nc, max_shift, 3, 3)
    assert bias.shape == (output_nc,)
    assert max_shift <= w, "circular disparity shift requires max_shift <= W"

    if tile_h is None:
        tile_h = _pick_tile_h(h)
    assert h % tile_h == 0, "H must be divisible by tile_h"
    n_h = h // tile_h

    # 1-row halo above / below every H tile (zeros at the image border) so the conv's
    # vertical taps never need cross-tile data inside the kernel.
    zero_row = jnp.zeros((b, c, 1, w), x.dtype)
    above = jnp.concatenate([zero_row, x[:, :, tile_h - 1:h - 1:tile_h, :]], axis=2)  # (B,C,n_h,W)
    below = jnp.concatenate([x[:, :, tile_h:h:tile_h, :], zero_row], axis=2)          # (B,C,n_h,W)
    halo = jnp.transpose(jnp.stack([above, below], axis=3), (0, 2, 1, 3, 4))          # (B,n_h,C,2,W)

    # Fold the 1/C channel-mean scale into the conv weights (conv is linear in the cost maps);
    # long axis last for compact SMEM packing.
    w_flat = (weight.astype(jnp.float32) / jnp.float32(c)).reshape(output_nc, max_shift * 9)
    b_flat = bias.astype(jnp.float32)

    return pl.pallas_call(
        _disparity_conv_kernel,
        out_shape=jax.ShapeDtypeStruct((b, output_nc, h, w), x.dtype),
        grid=(b, n_h),
        in_specs=[
            pl.BlockSpec(memory_space=pltpu.MemorySpace.SMEM),                    # weight
            pl.BlockSpec(memory_space=pltpu.MemorySpace.SMEM),                    # bias
            pl.BlockSpec((1, c, tile_h, w), lambda bi, hi: (bi, 0, hi, 0)),       # x tile
            pl.BlockSpec((1, 1, c, 2, w), lambda bi, hi: (bi, hi, 0, 0, 0)),      # halo rows
        ],
        out_specs=pl.BlockSpec((1, output_nc, tile_h, w), lambda bi, hi: (bi, 0, hi, 0)),
        compiler_params=pltpu.CompilerParams(
            dimension_semantics=("parallel", "parallel")),
    )(w_flat, b_flat, x, halo)


def _reference(x, weight, bias, max_shift):
    """Pure-JAX reference of the PyTorch forward."""
    diffs = []
    for s in range(1, max_shift + 1):
        rolled = jnp.roll(x, -s, axis=-1)
        diffs.append(jnp.mean(jnp.abs(x - rolled), axis=1))
    diff = jnp.stack(diffs, axis=1)  # (B, max_shift, H, W)
    out = lax.conv_general_dilated(
        diff, weight, window_strides=(1, 1), padding=((1, 1), (1, 1)),
        dimension_numbers=("NCHW", "OIHW", "NCHW"))
    return out + bias[None, :, None, None]


if __name__ == "__main__":
    # W = 128 keeps the lane dim dense (multiple of 128); H = 16 with tile_h = 8 exercises
    # the H-tiling + halo path (grid = (2, 2), all-parallel).
    B, C, H, W = 2, 4, 16, 128
    MAX_SHIFT, OUTPUT_NC = 4, 4

    key = jax.random.PRNGKey(0)
    kx, kw, kb = jax.random.split(key, 3)
    x = jax.random.normal(kx, (B, C, H, W), dtype=jnp.float32)
    # Deterministic synthetic Conv2d(max_shift -> output_nc, 3x3) parameters.
    weight = 0.1 * jax.random.normal(kw, (OUTPUT_NC, MAX_SHIFT, 3, 3), dtype=jnp.float32)
    bias = 0.1 * jax.random.normal(kb, (OUTPUT_NC,), dtype=jnp.float32)

    out = disparity_conv(x, weight, bias, max_shift=MAX_SHIFT, output_nc=OUTPUT_NC, tile_h=8)
    out = jax.block_until_ready(out)

    ref = jax.block_until_ready(_reference(x, weight, bias, MAX_SHIFT))
    assert out.shape == (B, OUTPUT_NC, H, W)
    assert jnp.allclose(out, ref, atol=1e-4, rtol=1e-4), float(jnp.max(jnp.abs(out - ref)))

    print("KERNEL_OK")
</pallas_src>

<mosaic_0001>
module attributes {stable_mosaic.version = 11 : i64} {
  func.func @_disparity_conv_kernel(%arg0: i32, %arg1: i32, %arg2: memref<4x36xf32, #tpu.memory_space<smem>>, %arg3: memref<4xf32, #tpu.memory_space<smem>>, %arg4: memref<1x4x8x128xf32, #tpu.memory_space<vmem>>, %arg5: memref<1x1x4x2x128xf32, #tpu.memory_space<vmem>>, %arg6: memref<1x4x8x128xf32, #tpu.memory_space<vmem>>) attributes {dimension_semantics = [#tpu.dimension_semantics<parallel>, #tpu.dimension_semantics<parallel>], iteration_bounds = array<i64: 2, 2>, scalar_prefetch = 0 : i64, scratch_operands = 0 : i64, tpu.core_type = #tpu.core_type<tc>, window_params = [{transform_indices = @transform_0, window_bounds = array<i64: 4, 36>}, {transform_indices = @transform_1, window_bounds = array<i64: 4>}, {transform_indices = @transform_2, window_bounds = array<i64: 1, 4, 8, 128>}, {transform_indices = @transform_3, window_bounds = array<i64: 1, 1, 4, 2, 128>}, {transform_indices = @transform_4, window_bounds = array<i64: 1, 4, 8, 128>}]} {
    %c0 = arith.constant 0 : index
    %c0_0 = arith.constant 0 : index
    %c0_1 = arith.constant 0 : index
    %c0_2 = arith.constant 0 : index
    %0 = vector.load %arg4[%c0, %c0_0, %c0_1, %c0_2] : memref<1x4x8x128xf32, #tpu.memory_space<vmem>>, vector<1x4x8x128xf32>
    %1 = vector.shape_cast %0 : vector<1x4x8x128xf32> to vector<4x8x128xf32>
    %c0_3 = arith.constant 0 : index
    %c0_4 = arith.constant 0 : index
    %c0_5 = arith.constant 0 : index
    %c0_6 = arith.constant 0 : index
    %c0_7 = arith.constant 0 : index
    %2 = vector.load %arg5[%c0_3, %c0_4, %c0_5, %c0_6, %c0_7] : memref<1x1x4x2x128xf32, #tpu.memory_space<vmem>>, vector<1x1x4x2x128xf32>
    %3 = vector.shape_cast %2 : vector<1x1x4x2x128xf32> to vector<4x2x128xf32>
    %4 = tpu.iota {dimensions = array<i32: 1>} : vector<8x128xi32>
    %c0_i32 = arith.constant 0 : i32
    %5 = vector.broadcast %c0_i32 : i32 to vector<8x128xi32>
    %6 = arith.cmpi sgt, %4, %5 : vector<8x128xi32>
    %c127_i32 = arith.constant 127 : i32
    %7 = vector.broadcast %c127_i32 : i32 to vector<8x128xi32>
    %8 = arith.cmpi slt, %4, %7 : vector<8x128xi32>
    %c0_8 = arith.constant 0 : index
    %9 = memref.load %arg3[%c0_8] : memref<4xf32, #tpu.memory_space<smem>>
    %10 = vector.broadcast %9 : f32 to vector<8x128xf32>
    %c1 = arith.constant 1 : index
    %11 = memref.load %arg3[%c1] : memref<4xf32, #tpu.memory_space<smem>>
    %12 = vector.broadcast %11 : f32 to vector<8x128xf32>
    %c2 = arith.constant 2 : index
    %13 = memref.load %arg3[%c2] : memref<4xf32, #tpu.memory_space<smem>>
    %14 = vector.broadcast %13 : f32 to vector<8x128xf32>
    %c3 = arith.constant 3 : index
    %15 = memref.load %arg3[%c3] : memref<4xf32, #tpu.memory_space<smem>>
    %16 = vector.broadcast %15 : f32 to vector<8x128xf32>
    %c127_i32_9 = arith.constant 127 : i32
    %17 = tpu.dynamic_rotate %1 by %c127_i32_9 dim 2 : vector<4x8x128xf32>, i32 -> vector<4x8x128xf32>
    %18 = arith.subf %1, %17 : vector<4x8x128xf32>
    %19 = math.absf %18 : vector<4x8x128xf32>
    %cst = arith.constant dense<0.000000e+00> : vector<8x128xf32>
    %20 = vector.multi_reduction <add>, %19, %cst [0] : vector<4x8x128xf32> to vector<8x128xf32>
    %c127_i32_10 = arith.constant 127 : i32
    %21 = tpu.dynamic_rotate %3 by %c127_i32_10 dim 2 : vector<4x2x128xf32>, i32 -> vector<4x2x128xf32>
    %22 = arith.subf %3, %21 : vector<4x2x128xf32>
    %23 = math.absf %22 : vector<4x2x128xf32>
    %cst_11 = arith.constant dense<0.000000e+00> : vector<2x128xf32>
    %24 = vector.multi_reduction <add>, %23, %cst_11 [0] : vector<4x2x128xf32> to vector<2x128xf32>
    %25 = vector.extract_strided_slice %24 {offsets = [0, 0], sizes = [1, 128], strides = [1, 1]} : vector<2x128xf32> to vector<1x128xf32>
    %26 = vector.extract_strided_slice %20 {offsets = [0, 0], sizes = [7, 128], strides = [1, 1]} : vector<8x128xf32> to vector<7x128xf32>
    %27 = tpu.concatenate %25, %26 in 0 : vector<1x128xf32>, vector<7x128xf32> -> vector<8x128xf32>
    %28 = vector.extract_strided_slice %20 {offsets = [1, 0], sizes = [7, 128], strides = [1, 1]} : vector<8x128xf32> to vector<7x128xf32>
    %29 = vector.extract_strided_slice %24 {offsets = [1, 0], sizes = [1, 128], strides = [1, 1]} : vector<2x128xf32> to vector<1x128xf32>
    %30 = tpu.concatenate %28, %29 in 0 : vector<7x128xf32>, vector<1x128xf32> -> vector<8x128xf32>
    %c0_12 = arith.constant 0 : index
    %c0_13 = arith.constant 0 : index
    %31 = memref.load %arg2[%c0_12, %c0_13] : memref<4x36xf32, #tpu.memory_space<smem>>
    %c0_14 = arith.constant 0 : index
    %c1_15 = arith.constant 1 : index
    %32 = memref.load %arg2[%c0_14, %c1_15] : memref<4x36xf32, #tpu.memory_space<smem>>
    %c0_16 = arith.constant 0 : index
    %c2_17 = arith.constant 2 : index
    %33 = memref.load %arg2[%c0_16, %c2_17] : memref<4x36xf32, #tpu.memory_space<smem>>
    %c0_18 = arith.constant 0 : index
    %c3_19 = arith.constant 3 : index
    %34 = memref.load %arg2[%c0_18, %c3_19] : memref<4x36xf32, #tpu.memory_space<smem>>
    %c0_20 = arith.constant 0 : index
    %c4 = arith.constant 4 : index
    %35 = memref.load %arg2[%c0_20, %c4] : memref<4x36xf32, #tpu.memory_space<smem>>
    %c0_21 = arith.constant 0 : index
    %c5 = arith.constant 5 : index
    %36 = memref.load %arg2[%c0_21, %c5] : memref<4x36xf32, #tpu.memory_space<smem>>
    %c0_22 = arith.constant 0 : index
    %c6 = arith.constant 6 : index
    %37 = memref.load %arg2[%c0_22, %c6] : memref<4x36xf32, #tpu.memory_space<smem>>
    %c0_23 = arith.constant 0 : index
    %c7 = arith.constant 7 : index
    %38 = memref.load %arg2[%c0_23, %c7] : memref<4x36xf32, #tpu.memory_space<smem>>
    %c0_24 = arith.constant 0 : index
    %c8 = arith.constant 8 : index
    %39 = memref.load %arg2[%c0_24, %c8] : memref<4x36xf32, #tpu.memory_space<smem>>
    %c1_25 = arith.constant 1 : index
    %c0_26 = arith.constant 0 : index
    %40 = memref.load %arg2[%c1_25, %c0_26] : memref<4x36xf32, #tpu.memory_space<smem>>
    %c1_27 = arith.constant 1 : index
    %c1_28 = arith.constant 1 : index
    %41 = memref.load %arg2[%c1_27, %c1_28] : memref<4x36xf32, #tpu.memory_space<smem>>
    %c1_29 = arith.constant 1 : index
    %c2_30 = arith.constant 2 : index
    %42 = memref.load %arg2[%c1_29, %c2_30] : memref<4x36xf32, #tpu.memory_space<smem>>
    %c1_31 = arith.constant 1 : index
    %c3_32 = arith.constant 3 : index
    %43 = memref.load %arg2[%c1_31, %c3_32] : memref<4x36xf32, #tpu.memory_space<smem>>
    %c1_33 = arith.constant 1 : index
    %c4_34 = arith.constant 4 : index
    %44 = memref.load %arg2[%c1_33, %c4_34] : memref<4x36xf32, #tpu.memory_space<smem>>
    %c1_35 = arith.constant 1 : index
    %c5_36 = arith.constant 5 : index
    %45 = memref.load %arg2[%c1_35, %c5_36] : memref<4x36xf32, #tpu.memory_space<smem>>
    %c1_37 = arith.constant 1 : index
    %c6_38 = arith.constant 6 : index
    %46 = memref.load %arg2[%c1_37, %c6_38] : memref<4x36xf32, #tpu.memory_space<smem>>
    %c1_39 = arith.constant 1 : index
    %c7_40 = arith.constant 7 : index
    %47 = memref.load %arg2[%c1_39, %c7_40] : memref<4x36xf32, #tpu.memory_space<smem>>
    %c1_41 = arith.constant 1 : index
    %c8_42 = arith.constant 8 : index
    %48 = memref.load %arg2[%c1_41, %c8_42] : memref<4x36xf32, #tpu.memory_space<smem>>
    %c2_43 = arith.constant 2 : index
    %c0_44 = arith.constant 0 : index
    %49 = memref.load %arg2[%c2_43, %c0_44] : memref<4x36xf32, #tpu.memory_space<smem>>
    %c2_45 = arith.constant 2 : index
    %c1_46 = arith.constant 1 : index
    %50 = memref.load %arg2[%c2_45, %c1_46] : memref<4x36xf32, #tpu.memory_space<smem>>
    %c2_47 = arith.constant 2 : index
    %c2_48 = arith.constant 2 : index
    %51 = memref.load %arg2[%c2_47, %c2_48] : memref<4x36xf32, #tpu.memory_space<smem>>
    %c2_49 = arith.constant 2 : index
    %c3_50 = arith.constant 3 : index
    %52 = memref.load %arg2[%c2_49, %c3_50] : memref<4x36xf32, #tpu.memory_space<smem>>
    %c2_51 = arith.constant 2 : index
    %c4_52 = arith.constant 4 : index
    %53 = memref.load %arg2[%c2_51, %c4_52] : memref<4x36xf32, #tpu.memory_space<smem>>
    %c2_53 = arith.constant 2 : index
    %c5_54 = arith.constant 5 : index
    %54 = memref.load %arg2[%c2_53, %c5_54] : memref<4x36xf32, #tpu.memory_space<smem>>
    %c2_55 = arith.constant 2 : index
    %c6_56 = arith.constant 6 : index
    %55 = memref.load %arg2[%c2_55, %c6_56] : memref<4x36xf32, #tpu.memory_space<smem>>
    %c2_57 = arith.constant 2 : index
    %c7_58 = arith.constant 7 : index
    %56 = memref.load %arg2[%c2_57, %c7_58] : memref<4x36xf32, #tpu.memory_space<smem>>
    %c2_59 = arith.constant 2 : index
    %c8_60 = arith.constant 8 : index
    %57 = memref.load %arg2[%c2_59, %c8_60] : memref<4x36xf32, #tpu.memory_space<smem>>
    %c3_61 = arith.constant 3 : index
    %c0_62 = arith.constant 0 : index
    %58 = memref.load %arg2[%c3_61, %c0_62] : memref<4x36xf32, #tpu.memory_space<smem>>
    %c3_63 = arith.constant 3 : index
    %c1_64 = arith.constant 1 : index
    %59 = memref.load %arg2[%c3_63, %c1_64] : memref<4x36xf32, #tpu.memory_space<smem>>
    %c3_65 = arith.constant 3 : index
    %c2_66 = arith.constant 2 : index
    %60 = memref.load %arg2[%c3_65, %c2_66] : memref<4x36xf32, #tpu.memory_space<smem>>
    %c3_67 = arith.constant 3 : index
    %c3_68 = arith.constant 3 : index
    %61 = memref.load %arg2[%c3_67, %c3_68] : memref<4x36xf32, #tpu.memory_space<smem>>
    %c3_69 = arith.constant 3 : index
    %c4_70 = arith.constant 4 : index
    %62 = memref.load %arg2[%c3_69, %c4_70] : memref<4x36xf32, #tpu.memory_space<smem>>
    %c3_71 = arith.constant 3 : index
    %c5_72 = arith.constant 5 : index
    %63 = memref.load %arg2[%c3_71, %c5_72] : memref<4x36xf32, #tpu.memory_space<smem>>
    %c3_73 = arith.constant 3 : index
    %c6_74 = arith.constant 6 : index
    %64 = memref.load %arg2[%c3_73, %c6_74] : memref<4x36xf32, #tpu.memory_space<smem>>
    %c3_75 = arith.constant 3 : index
    %c7_76 = arith.constant 7 : index
    %65 = memref.load %arg2[%c3_75, %c7_76] : memref<4x36xf32, #tpu.memory_space<smem>>
    %c3_77 = arith.constant 3 : index
    %c8_78 = arith.constant 8 : index
    %66 = memref.load %arg2[%c3_77, %c8_78] : memref<4x36xf32, #tpu.memory_space<smem>>
    %c1_i32 = arith.constant 1 : i32
    %67 = tpu.dynamic_rotate %27 by %c1_i32 dim 1 : vector<8x128xf32>, i32 -> vector<8x128xf32>
    %cst_79 = arith.constant 0.000000e+00 : f32
    %68 = vector.broadcast %cst_79 : f32 to vector<8x128xf32>
    %69 = arith.select %6, %67, %68 : vector<8x128xi1>, vector<8x128xf32>
    %c127_i32_80 = arith.constant 127 : i32
    %70 = tpu.dynamic_rotate %27 by %c127_i32_80 dim 1 : vector<8x128xf32>, i32 -> vector<8x128xf32>
    %cst_81 = arith.constant 0.000000e+00 : f32
    %71 = vector.broadcast %cst_81 : f32 to vector<8x128xf32>
    %72 = arith.select %8, %70, %71 : vector<8x128xi1>, vector<8x128xf32>
    %73 = vector.broadcast %31 : f32 to vector<8x128xf32>
    %74 = arith.mulf %73, %69 : vector<8x128xf32>
    %75 = arith.addf %10, %74 : vector<8x128xf32>
    %76 = vector.broadcast %40 : f32 to vector<8x128xf32>
    %77 = arith.mulf %76, %69 : vector<8x128xf32>
    %78 = arith.addf %12, %77 : vector<8x128xf32>
    %79 = vector.broadcast %49 : f32 to vector<8x128xf32>
    %80 = arith.mulf %79, %69 : vector<8x128xf32>
    %81 = arith.addf %14, %80 : vector<8x128xf32>
    %82 = vector.broadcast %58 : f32 to vector<8x128xf32>
    %83 = arith.mulf %82, %69 : vector<8x128xf32>
    %84 = arith.addf %16, %83 : vector<8x128xf32>
    %85 = vector.broadcast %32 : f32 to vector<8x128xf32>
    %86 = arith.mulf %85, %27 : vector<8x128xf32>
    %87 = arith.addf %75, %86 : vector<8x128xf32>
    %88 = vector.broadcast %41 : f32 to vector<8x128xf32>
    %89 = arith.mulf %88, %27 : vector<8x128xf32>
    %90 = arith.addf %78, %89 : vector<8x128xf32>
    %91 = vector.broadcast %50 : f32 to vector<8x128xf32>
    %92 = arith.mulf %91, %27 : vector<8x128xf32>
    %93 = arith.addf %81, %92 : vector<8x128xf32>
    %94 = vector.broadcast %59 : f32 to vector<8x128xf32>
    %95 = arith.mulf %94, %27 : vector<8x128xf32>
    %96 = arith.addf %84, %95 : vector<8x128xf32>
    %97 = vector.broadcast %33 : f32 to vector<8x128xf32>
    %98 = arith.mulf %97, %72 : vector<8x128xf32>
    %99 = arith.addf %87, %98 : vector<8x128xf32>
    %100 = vector.broadcast %42 : f32 to vector<8x128xf32>
    %101 = arith.mulf %100, %72 : vector<8x128xf32>
    %102 = arith.addf %90, %101 : vector<8x128xf32>
    %103 = vector.broadcast %51 : f32 to vector<8x128xf32>
    %104 = arith.mulf %103, %72 : vector<8x128xf32>
    %105 = arith.addf %93, %104 : vector<8x128xf32>
    %106 = vector.broadcast %60 : f32 to vector<8x128xf32>
    %107 = arith.mulf %106, %72 : vector<8x128xf32>
    %108 = arith.addf %96, %107 : vector<8x128xf32>
    %c1_i32_82 = arith.constant 1 : i32
    %109 = tpu.dynamic_rotate %20 by %c1_i32_82 dim 1 : vector<8x128xf32>, i32 -> vector<8x128xf32>
    %cst_83 = arith.constant 0.000000e+00 : f32
    %110 = vector.broadcast %cst_83 : f32 to vector<8x128xf32>
    %111 = arith.select %6, %109, %110 : vector<8x128xi1>, vector<8x128xf32>
    %c127_i32_84 = arith.constant 127 : i32
    %112 = tpu.dynamic_rotate %20 by %c127_i32_84 dim 1 : vector<8x128xf32>, i32 -> vector<8x128xf32>
    %cst_85 = arith.constant 0.000000e+00 : f32
    %113 = vector.broadcast %cst_85 : f32 to vector<8x128xf32>
    %114 = arith.select %8, %112, %113 : vector<8x128xi1>, vector<8x128xf32>
    %115 = vector.broadcast %34 : f32 to vector<8x128xf32>
    %116 = arith.mulf %115, %111 : vector<8x128xf32>
    %117 = arith.addf %99, %116 : vector<8x128xf32>
    %118 = vector.broadcast %43 : f32 to vector<8x128xf32>
    %119 = arith.mulf %118, %111 : vector<8x128xf32>
    %120 = arith.addf %102, %119 : vector<8x128xf32>
    %121 = vector.broadcast %52 : f32 to vector<8x128xf32>
    %122 = arith.mulf %121, %111 : vector<8x128xf32>
    %123 = arith.addf %105, %122 : vector<8x128xf32>
    %124 = vector.broadcast %61 : f32 to vector<8x128xf32>
    %125 = arith.mulf %124, %111 : vector<8x128xf32>
    %126 = arith.addf %108, %125 : vector<8x128xf32>
    %127 = vector.broadcast %35 : f32 to vector<8x128xf32>
    %128 = arith.mulf %127, %20 : vector<8x128xf32>
    %129 = arith.addf %117, %128 : vector<8x128xf32>
    %130 = vector.broadcast %44 : f32 to vector<8x128xf32>
    %131 = arith.mulf %130, %20 : vector<8x128xf32>
    %132 = arith.addf %120, %131 : vector<8x128xf32>
    %133 = vector.broadcast %53 : f32 to vector<8x128xf32>
    %134 = arith.mulf %133, %20 : vector<8x128xf32>
    %135 = arith.addf %123, %134 : vector<8x128xf32>
    %136 = vector.broadcast %62 : f32 to vector<8x128xf32>
    %137 = arith.mulf %136, %20 : vector<8x128xf32>
    %138 = arith.addf %126, %137 : vector<8x128xf32>
    %139 = vector.broadcast %36 : f32 to vector<8x128xf32>
    %140 = arith.mulf %139, %114 : vector<8x128xf32>
    %141 = arith.addf %129, %140 : vector<8x128xf32>
    %142 = vector.broadcast %45 : f32 to vector<8x128xf32>
    %143 = arith.mulf %142, %114 : vector<8x128xf32>
    %144 = arith.addf %132, %143 : vector<8x128xf32>
    %145 = vector.broadcast %54 : f32 to vector<8x128xf32>
    %146 = arith.mulf %145, %114 : vector<8x128xf32>
    %147 = arith.addf %135, %146 : vector<8x128xf32>
    %148 = vector.broadcast %63 : f32 to vector<8x128xf32>
    %149 = arith.mulf %148, %114 : vector<8x128xf32>
    %150 = arith.addf %138, %149 : vector<8x128xf32>
    %c1_i32_86 = arith.constant 1 : i32
    %151 = tpu.dynamic_rotate %30 by %c1_i32_86 dim 1 : vector<8x128xf32>, i32 -> vector<8x128xf32>
    %cst_87 = arith.constant 0.000000e+00 : f32
    %152 = vector.broadcast %cst_87 : f32 to vector<8x128xf32>
    %153 = arith.select %6, %151, %152 : vector<8x128xi1>, vector<8x128xf32>
    %c127_i32_88 = arith.constant 127 : i32
    %154 = tpu.dynamic_rotate %30 by %c127_i32_88 dim 1 : vector<8x128xf32>, i32 -> vector<8x128xf32>
    %cst_89 = arith.constant 0.000000e+00 : f32
    %155 = vector.broadcast %cst_89 : f32 to vector<8x128xf32>
    %156 = arith.select %8, %154, %155 : vector<8x128xi1>, vector<8x128xf32>
    %157 = vector.broadcast %37 : f32 to vector<8x128xf32>
    %158 = arith.mulf %157, %153 : vector<8x128xf32>
    %159 = arith.addf %141, %158 : vector<8x128xf32>
    %160 = vector.broadcast %46 : f32 to vector<8x128xf32>
    %161 = arith.mulf %160, %153 : vector<8x128xf32>
    %162 = arith.addf %144, %161 : vector<8x128xf32>
    %163 = vector.broadcast %55 : f32 to vector<8x128xf32>
    %164 = arith.mulf %163, %153 : vector<8x128xf32>
    %165 = arith.addf %147, %164 : vector<8x128xf32>
    %166 = vector.broadcast %64 : f32 to vector<8x128xf32>
    %167 = arith.mulf %166, %153 : vector<8x128xf32>
    %168 = arith.addf %150, %167 : vector<8x128xf32>
    %169 = vector.broadcast %38 : f32 to vector<8x128xf32>
    %170 = arith.mulf %169, %30 : vector<8x128xf32>
    %171 = arith.addf %159, %170 : vector<8x128xf32>
    %172 = vector.broadcast %47 : f32 to vector<8x128xf32>
    %173 = arith.mulf %172, %30 : vector<8x128xf32>
    %174 = arith.addf %162, %173 : vector<8x128xf32>
    %175 = vector.broadcast %56 : f32 to vector<8x128xf32>
    %176 = arith.mulf %175, %30 : vector<8x128xf32>
    %177 = arith.addf %165, %176 : vector<8x128xf32>
    %178 = vector.broadcast %65 : f32 to vector<8x128xf32>
    %179 = arith.mulf %178, %30 : vector<8x128xf32>
    %180 = arith.addf %168, %179 : vector<8x128xf32>
    %181 = vector.broadcast %39 : f32 to vector<8x128xf32>
    %182 = arith.mulf %181, %156 : vector<8x128xf32>
    %183 = arith.addf %171, %182 : vector<8x128xf32>
    %184 = vector.broadcast %48 : f32 to vector<8x128xf32>
    %185 = arith.mulf %184, %156 : vector<8x128xf32>
    %186 = arith.addf %174, %185 : vector<8x128xf32>
    %187 = vector.broadcast %57 : f32 to vector<8x128xf32>
    %188 = arith.mulf %187, %156 : vector<8x128xf32>
    %189 = arith.addf %177, %188 : vector<8x128xf32>
    %190 = vector.broadcast %66 : f32 to vector<8x128xf32>
    %191 = arith.mulf %190, %156 : vector<8x128xf32>
    %192 = arith.addf %180, %191 : vector<8x128xf32>
    %c126_i32 = arith.constant 126 : i32
    %193 = tpu.dynamic_rotate %1 by %c126_i32 dim 2 : vector<4x8x128xf32>, i32 -> vector<4x8x128xf32>
    %194 = arith.subf %1, %193 : vector<4x8x128xf32>
    %195 = math.absf %194 : vector<4x8x128xf32>
    %cst_90 = arith.constant dense<0.000000e+00> : vector<8x128xf32>
    %196 = vector.multi_reduction <add>, %195, %cst_90 [0] : vector<4x8x128xf32> to vector<8x128xf32>
    %c126_i32_91 = arith.constant 126 : i32
    %197 = tpu.dynamic_rotate %3 by %c126_i32_91 dim 2 : vector<4x2x128xf32>, i32 -> vector<4x2x128xf32>
    %198 = arith.subf %3, %197 : vector<4x2x128xf32>
    %199 = math.absf %198 : vector<4x2x128xf32>
    %cst_92 = arith.constant dense<0.000000e+00> : vector<2x128xf32>
    %200 = vector.multi_reduction <add>, %199, %cst_92 [0] : vector<4x2x128xf32> to vector<2x128xf32>
    %201 = vector.extract_strided_slice %200 {offsets = [0, 0], sizes = [1, 128], strides = [1, 1]} : vector<2x128xf32> to vector<1x128xf32>
    %202 = vector.extract_strided_slice %196 {offsets = [0, 0], sizes = [7, 128], strides = [1, 1]} : vector<8x128xf32> to vector<7x128xf32>
    %203 = tpu.concatenate %201, %202 in 0 : vector<1x128xf32>, vector<7x128xf32> -> vector<8x128xf32>
    %204 = vector.extract_strided_slice %196 {offsets = [1, 0], sizes = [7, 128], strides = [1, 1]} : vector<8x128xf32> to vector<7x128xf32>
    %205 = vector.extract_strided_slice %200 {offsets = [1, 0], sizes = [1, 128], strides = [1, 1]} : vector<2x128xf32> to vector<1x128xf32>
    %206 = tpu.concatenate %204, %205 in 0 : vector<7x128xf32>, vector<1x128xf32> -> vector<8x128xf32>
    %c0_93 = arith.constant 0 : index
    %c9 = arith.constant 9 : index
    %207 = memref.load %arg2[%c0_93, %c9] : memref<4x36xf32, #tpu.memory_space<smem>>
    %c0_94 = arith.constant 0 : index
    %c10 = arith.constant 10 : index
    %208 = memref.load %arg2[%c0_94, %c10] : memref<4x36xf32, #tpu.memory_space<smem>>
    %c0_95 = arith.constant 0 : index
    %c11 = arith.constant 11 : index
    %209 = memref.load %arg2[%c0_95, %c11] : memref<4x36xf32, #tpu.memory_space<smem>>
    %c0_96 = arith.constant 0 : index
    %c12 = arith.constant 12 : index
    %210 = memref.load %arg2[%c0_96, %c12] : memref<4x36xf32, #tpu.memory_space<smem>>
    %c0_97 = arith.constant 0 : index
    %c13 = arith.constant 13 : index
    %211 = memref.load %arg2[%c0_97, %c13] : memref<4x36xf32, #tpu.memory_space<smem>>
    %c0_98 = arith.constant 0 : index
    %c14 = arith.constant 14 : index
    %212 = memref.load %arg2[%c0_98, %c14] : memref<4x36xf32, #tpu.memory_space<smem>>
    %c0_99 = arith.constant 0 : index
    %c15 = arith.constant 15 : index
    %213 = memref.load %arg2[%c0_99, %c15] : memref<4x36xf32, #tpu.memory_space<smem>>
    %c0_100 = arith.constant 0 : index
    %c16 = arith.constant 16 : index
    %214 = memref.load %arg2[%c0_100, %c16] : memref<4x36xf32, #tpu.memory_space<smem>>
    %c0_101 = arith.constant 0 : index
    %c17 = arith.constant 17 : index
    %215 = memref.load %arg2[%c0_101, %c17] : memref<4x36xf32, #tpu.memory_space<smem>>
    %c1_102 = arith.constant 1 : index
    %c9_103 = arith.constant 9 : index
    %216 = memref.load %arg2[%c1_102, %c9_103] : memref<4x36xf32, #tpu.memory_space<smem>>
    %c1_104 = arith.constant 1 : index
    %c10_105 = arith.constant 10 : index
    %217 = memref.load %arg2[%c1_104, %c10_105] : memref<4x36xf32, #tpu.memory_space<smem>>
    %c1_106 = arith.constant 1 : index
    %c11_107 = arith.constant 11 : index
    %218 = memref.load %arg2[%c1_106, %c11_107] : memref<4x36xf32, #tpu.memory_space<smem>>
    %c1_108 = arith.constant 1 : index
    %c12_109 = arith.constant 12 : index
    %219 = memref.load %arg2[%c1_108, %c12_109] : memref<4x36xf32, #tpu.memory_space<smem>>
    %c1_110 = arith.constant 1 : index
    %c13_111 = arith.constant 13 : index
    %220 = memref.load %arg2[%c1_110, %c13_111] : memref<4x36xf32, #tpu.memory_space<smem>>
    %c1_112 = arith.constant 1 : index
    %c14_113 = arith.constant 14 : index
    %221 = memref.load %arg2[%c1_112, %c14_113] : memref<4x36xf32, #tpu.memory_space<smem>>
    %c1_114 = arith.constant 1 : index
    %c15_115 = arith.constant 15 : index
    %222 = memref.load %arg2[%c1_114, %c15_115] : memref<4x36xf32, #tpu.memory_space<smem>>
    %c1_116 = arith.constant 1 : index
    %c16_117 = arith.constant 16 : index
    %223 = memref.load %arg2[%c1_116, %c16_117] : memref<4x36xf32, #tpu.memory_space<smem>>
    %c1_118 = arith.constant 1 : index
    %c17_119 = arith.constant 17 : index
    %224 = memref.load %arg2[%c1_118, %c17_119] : memref<4x36xf32, #tpu.memory_space<smem>>
    %c2_120 = arith.constant 2 : index
    %c9_121 = arith.constant 9 : index
    %225 = memref.load %arg2[%c2_120, %c9_121] : memref<4x36xf32, #tpu.memory_space<smem>>
    %c2_122 = arith.constant 2 : index
    %c10_123 = arith.constant 10 : index
    %226 = memref.load %arg2[%c2_122, %c10_123] : memref<4x36xf32, #tpu.memory_space<smem>>
    %c2_124 = arith.constant 2 : index
    %c11_125 = arith.constant 11 : index
    %227 = memref.load %arg2[%c2_124, %c11_125] : memref<4x36xf32, #tpu.memory_space<smem>>
    %c2_126 = arith.constant 2 : index
    %c12_127 = arith.constant 12 : index
    %228 = memref.load %arg2[%c2_126, %c12_127] : memref<4x36xf32, #tpu.memory_space<smem>>
    %c2_128 = arith.constant 2 : index
    %c13_129 = arith.constant 13 : index
    %229 = memref.load %arg2[%c2_128, %c13_129] : memref<4x36xf32, #tpu.memory_space<smem>>
    %c2_130 = arith.constant 2 : index
    %c14_131 = arith.constant 14 : index
    %230 = memref.load %arg2[%c2_130, %c14_131] : memref<4x36xf32, #tpu.memory_space<smem>>
    %c2_132 = arith.constant 2 : index
    %c15_133 = arith.constant 15 : index
    %231 = memref.load %arg2[%c2_132, %c15_133] : memref<4x36xf32, #tpu.memory_space<smem>>
    %c2_134 = arith.constant 2 : index
    %c16_135 = arith.constant 16 : index
    %232 = memref.load %arg2[%c2_134, %c16_135] : memref<4x36xf32, #tpu.memory_space<smem>>
    %c2_136 = arith.constant 2 : index
    %c17_137 = arith.constant 17 : index
    %233 = memref.load %arg2[%c2_136, %c17_137] : memref<4x36xf32, #tpu.memory_space<smem>>
    %c3_138 = arith.constant 3 : index
    %c9_139 = arith.constant 9 : index
    %234 = memref.load %arg2[%c3_138, %c9_139] : memref<4x36xf32, #tpu.memory_space<smem>>
    %c3_140 = arith.constant 3 : index
    %c10_141 = arith.constant 10 : index
    %235 = memref.load %arg2[%c3_140, %c10_141] : memref<4x36xf32, #tpu.memory_space<smem>>
    %c3_142 = arith.constant 3 : index
    %c11_143 = arith.constant 11 : index
    %236 = memref.load %arg2[%c3_142, %c11_143] : memref<4x36xf32, #tpu.memory_space<smem>>
    %c3_144 = arith.constant 3 : index
    %c12_145 = arith.constant 12 : index
    %237 = memref.load %arg2[%c3_144, %c12_145] : memref<4x36xf32, #tpu.memory_space<smem>>
    %c3_146 = arith.constant 3 : index
    %c13_147 = arith.constant 13 : index
    %238 = memref.load %arg2[%c3_146, %c13_147] : memref<4x36xf32, #tpu.memory_space<smem>>
    %c3_148 = arith.constant 3 : index
    %c14_149 = arith.constant 14 : index
    %239 = memref.load %arg2[%c3_148, %c14_149] : memref<4x36xf32, #tpu.memory_space<smem>>
    %c3_150 = arith.constant 3 : index
    %c15_151 = arith.constant 15 : index
    %240 = memref.load %arg2[%c3_150, %c15_151] : memref<4x36xf32, #tpu.memory_space<smem>>
    %c3_152 = arith.constant 3 : index
    %c16_153 = arith.constant 16 : index
    %241 = memref.load %arg2[%c3_152, %c16_153] : memref<4x36xf32, #tpu.memory_space<smem>>
    %c3_154 = arith.constant 3 : index
    %c17_155 = arith.constant 17 : index
    %242 = memref.load %arg2[%c3_154, %c17_155] : memref<4x36xf32, #tpu.memory_space<smem>>
    %c1_i32_156 = arith.constant 1 : i32
    %243 = tpu.dynamic_rotate %203 by %c1_i32_156 dim 1 : vector<8x128xf32>, i32 -> vector<8x128xf32>
    %cst_157 = arith.constant 0.000000e+00 : f32
    %244 = vector.broadcast %cst_157 : f32 to vector<8x128xf32>
    %245 = arith.select %6, %243, %244 : vector<8x128xi1>, vector<8x128xf32>
    %c127_i32_158 = arith.constant 127 : i32
    %246 = tpu.dynamic_rotate %203 by %c127_i32_158 dim 1 : vector<8x128xf32>, i32 -> vector<8x128xf32>
    %cst_159 = arith.constant 0.000000e+00 : f32
    %247 = vector.broadcast %cst_159 : f32 to vector<8x128xf32>
    %248 = arith.select %8, %246, %247 : vector<8x128xi1>, vector<8x128xf32>
    %249 = vector.broadcast %207 : f32 to vector<8x128xf32>
    %250 = arith.mulf %249, %245 : vector<8x128xf32>
    %251 = arith.addf %183, %250 : vector<8x128xf32>
    %252 = vector.broadcast %216 : f32 to vector<8x128xf32>
    %253 = arith.mulf %252, %245 : vector<8x128xf32>
    %254 = arith.addf %186, %253 : vector<8x128xf32>
    %255 = vector.broadcast %225 : f32 to vector<8x128xf32>
    %256 = arith.mulf %255, %245 : vector<8x128xf32>
    %257 = arith.addf %189, %256 : vector<8x128xf32>
    %258 = vector.broadcast %234 : f32 to vector<8x128xf32>
    %259 = arith.mulf %258, %245 : vector<8x128xf32>
    %260 = arith.addf %192, %259 : vector<8x128xf32>
    %261 = vector.broadcast %208 : f32 to vector<8x128xf32>
    %262 = arith.mulf %261, %203 : vector<8x128xf32>
    %263 = arith.addf %251, %262 : vector<8x128xf32>
    %264 = vector.broadcast %217 : f32 to vector<8x128xf32>
    %265 = arith.mulf %264, %203 : vector<8x128xf32>
    %266 = arith.addf %254, %265 : vector<8x128xf32>
    %267 = vector.broadcast %226 : f32 to vector<8x128xf32>
    %268 = arith.mulf %267, %203 : vector<8x128xf32>
    %269 = arith.addf %257, %268 : vector<8x128xf32>
    %270 = vector.broadcast %235 : f32 to vector<8x128xf32>
    %271 = arith.mulf %270, %203 : vector<8x128xf32>
    %272 = arith.addf %260, %271 : vector<8x128xf32>
    %273 = vector.broadcast %209 : f32 to vector<8x128xf32>
    %274 = arith.mulf %273, %248 : vector<8x128xf32>
    %275 = arith.addf %263, %274 : vector<8x128xf32>
    %276 = vector.broadcast %218 : f32 to vector<8x128xf32>
    %277 = arith.mulf %276, %248 : vector<8x128xf32>
    %278 = arith.addf %266, %277 : vector<8x128xf32>
    %279 = vector.broadcast %227 : f32 to vector<8x128xf32>
    %280 = arith.mulf %279, %248 : vector<8x128xf32>
    %281 = arith.addf %269, %280 : vector<8x128xf32>
    %282 = vector.broadcast %236 : f32 to vector<8x128xf32>
    %283 = arith.mulf %282, %248 : vector<8x128xf32>
    %284 = arith.addf %272, %283 : vector<8x128xf32>
    %c1_i32_160 = arith.constant 1 : i32
    %285 = tpu.dynamic_rotate %196 by %c1_i32_160 dim 1 : vector<8x128xf32>, i32 -> vector<8x128xf32>
    %cst_161 = arith.constant 0.000000e+00 : f32
    %286 = vector.broadcast %cst_161 : f32 to vector<8x128xf32>
    %287 = arith.select %6, %285, %286 : vector<8x128xi1>, vector<8x128xf32>
    %c127_i32_162 = arith.constant 127 : i32
    %288 = tpu.dynamic_rotate %196 by %c127_i32_162 dim 1 : vector<8x128xf32>, i32 -> vector<8x128xf32>
    %cst_163 = arith.constant 0.000000e+00 : f32
    %289 = vector.broadcast %cst_163 : f32 to vector<8x128xf32>
    %290 = arith.select %8, %288, %289 : vector<8x128xi1>, vector<8x128xf32>
    %291 = vector.broadcast %210 : f32 to vector<8x128xf32>
    %292 = arith.mulf %291, %287 : vector<8x128xf32>
    %293 = arith.addf %275, %292 : vector<8x128xf32>
    %294 = vector.broadcast %219 : f32 to vector<8x128xf32>
    %295 = arith.mulf %294, %287 : vector<8x128xf32>
    %296 = arith.addf %278, %295 : vector<8x128xf32>
    %297 = vector.broadcast %228 : f32 to vector<8x128xf32>
    %298 = arith.mulf %297, %287 : vector<8x128xf32>
    %299 = arith.addf %281, %298 : vector<8x128xf32>
    %300 = vector.broadcast %237 : f32 to vector<8x128xf32>
    %301 = arith.mulf %300, %287 : vector<8x128xf32>
    %302 = arith.addf %284, %301 : vector<8x128xf32>
    %303 = vector.broadcast %211 : f32 to vector<8x128xf32>
    %304 = arith.mulf %303, %196 : vector<8x128xf32>
    %305 = arith.addf %293, %304 : vector<8x128xf32>
    %306 = vector.broadcast %220 : f32 to vector<8x128xf32>
    %307 = arith.mulf %306, %196 : vector<8x128xf32>
    %308 = arith.addf %296, %307 : vector<8x128xf32>
    %309 = vector.broadcast %229 : f32 to vector<8x128xf32>
    %310 = arith.mulf %309, %196 : vector<8x128xf32>
    %311 = arith.addf %299, %310 : vector<8x128xf32>
    %312 = vector.broadcast %238 : f32 to vector<8x128xf32>
    %313 = arith.mulf %312, %196 : vector<8x128xf32>
    %314 = arith.addf %302, %313 : vector<8x128xf32>
    %315 = vector.broadcast %212 : f32 to vector<8x128xf32>
    %316 = arith.mulf %315, %290 : vector<8x128xf32>
    %317 = arith.addf %305, %316 : vector<8x128xf32>
    %318 = vector.broadcast %221 : f32 to vector<8x128xf32>
    %319 = arith.mulf %318, %290 : vector<8x128xf32>
    %320 = arith.addf %308, %319 : vector<8x128xf32>
    %321 = vector.broadcast %230 : f32 to vector<8x128xf32>
    %322 = arith.mulf %321, %290 : vector<8x128xf32>
    %323 = arith.addf %311, %322 : vector<8x128xf32>
    %324 = vector.broadcast %239 : f32 to vector<8x128xf32>
    %325 = arith.mulf %324, %290 : vector<8x128xf32>
    %326 = arith.addf %314, %325 : vector<8x128xf32>
    %c1_i32_164 = arith.constant 1 : i32
    %327 = tpu.dynamic_rotate %206 by %c1_i32_164 dim 1 : vector<8x128xf32>, i32 -> vector<8x128xf32>
    %cst_165 = arith.constant 0.000000e+00 : f32
    %328 = vector.broadcast %cst_165 : f32 to vector<8x128xf32>
    %329 = arith.select %6, %327, %328 : vector<8x128xi1>, vector<8x128xf32>
    %c127_i32_166 = arith.constant 127 : i32
    %330 = tpu.dynamic_rotate %206 by %c127_i32_166 dim 1 : vector<8x128xf32>, i32 -> vector<8x128xf32>
    %cst_167 = arith.constant 0.000000e+00 : f32
    %331 = vector.broadcast %cst_167 : f32 to vector<8x128xf32>
    %332 = arith.select %8, %330, %331 : vector<8x128xi1>, vector<8x128xf32>
    %333 = vector.broadcast %213 : f32 to vector<8x128xf32>
    %334 = arith.mulf %333, %329 : vector<8x128xf32>
    %335 = arith.addf %317, %334 : vector<8x128xf32>
    %336 = vector.broadcast %222 : f32 to vector<8x128xf32>
    %337 = arith.mulf %336, %329 : vector<8x128xf32>
    %338 = arith.addf %320, %337 : vector<8x128xf32>
    %339 = vector.broadcast %231 : f32 to vector<8x128xf32>
    %340 = arith.mulf %339, %329 : vector<8x128xf32>
    %341 = arith.addf %323, %340 : vector<8x128xf32>
    %342 = vector.broadcast %240 : f32 to vector<8x128xf32>
    %343 = arith.mulf %342, %329 : vector<8x128xf32>
    %344 = arith.addf %326, %343 : vector<8x128xf32>
    %345 = vector.broadcast %214 : f32 to vector<8x128xf32>
    %346 = arith.mulf %345, %206 : vector<8x128xf32>
    %347 = arith.addf %335, %346 : vector<8x128xf32>
    %348 = vector.broadcast %223 : f32 to vector<8x128xf32>
    %349 = arith.mulf %348, %206 : vector<8x128xf32>
    %350 = arith.addf %338, %349 : vector<8x128xf32>
    %351 = vector.broadcast %232 : f32 to vector<8x128xf32>
    %352 = arith.mulf %351, %206 : vector<8x128xf32>
    %353 = arith.addf %341, %352 : vector<8x128xf32>
    %354 = vector.broadcast %241 : f32 to vector<8x128xf32>
    %355 = arith.mulf %354, %206 : vector<8x128xf32>
    %356 = arith.addf %344, %355 : vector<8x128xf32>
    %357 = vector.broadcast %215 : f32 to vector<8x128xf32>
    %358 = arith.mulf %357, %332 : vector<8x128xf32>
    %359 = arith.addf %347, %358 : vector<8x128xf32>
    %360 = vector.broadcast %224 : f32 to vector<8x128xf32>
    %361 = arith.mulf %360, %332 : vector<8x128xf32>
    %362 = arith.addf %350, %361 : vector<8x128xf32>
    %363 = vector.broadcast %233 : f32 to vector<8x128xf32>
    %364 = arith.mulf %363, %332 : vector<8x128xf32>
    %365 = arith.addf %353, %364 : vector<8x128xf32>
    %366 = vector.broadcast %242 : f32 to vector<8x128xf32>
    %367 = arith.mulf %366, %332 : vector<8x128xf32>
    %368 = arith.addf %356, %367 : vector<8x128xf32>
    %c125_i32 = arith.constant 125 : i32
    %369 = tpu.dynamic_rotate %1 by %c125_i32 dim 2 : vector<4x8x128xf32>, i32 -> vector<4x8x128xf32>
    %370 = arith.subf %1, %369 : vector<4x8x128xf32>
    %371 = math.absf %370 : vector<4x8x128xf32>
    %cst_168 = arith.constant dense<0.000000e+00> : vector<8x128xf32>
    %372 = vector.multi_reduction <add>, %371, %cst_168 [0] : vector<4x8x128xf32> to vector<8x128xf32>
    %c125_i32_169 = arith.constant 125 : i32
    %373 = tpu.dynamic_rotate %3 by %c125_i32_169 dim 2 : vector<4x2x128xf32>, i32 -> vector<4x2x128xf32>
    %374 = arith.subf %3, %373 : vector<4x2x128xf32>
    %375 = math.absf %374 : vector<4x2x128xf32>
    %cst_170 = arith.constant dense<0.000000e+00> : vector<2x128xf32>
    %376 = vector.multi_reduction <add>, %375, %cst_170 [0] : vector<4x2x128xf32> to vector<2x128xf32>
    %377 = vector.extract_strided_slice %376 {offsets = [0, 0], sizes = [1, 128], strides = [1, 1]} : vector<2x128xf32> to vector<1x128xf32>
    %378 = vector.extract_strided_slice %372 {offsets = [0, 0], sizes = [7, 128], strides = [1, 1]} : vector<8x128xf32> to vector<7x128xf32>
    %379 = tpu.concatenate %377, %378 in 0 : vector<1x128xf32>, vector<7x128xf32> -> vector<8x128xf32>
    %380 = vector.extract_strided_slice %372 {offsets = [1, 0], sizes = [7, 128], strides = [1, 1]} : vector<8x128xf32> to vector<7x128xf32>
    %381 = vector.extract_strided_slice %376 {offsets = [1, 0], sizes = [1, 128], strides = [1, 1]} : vector<2x128xf32> to vector<1x128xf32>
    %382 = tpu.concatenate %380, %381 in 0 : vector<7x128xf32>, vector<1x128xf32> -> vector<8x128xf32>
    %c0_171 = arith.constant 0 : index
    %c18 = arith.constant 18 : index
    %383 = memref.load %arg2[%c0_171, %c18] : memref<4x36xf32, #tpu.memory_space<smem>>
    %c0_172 = arith.constant 0 : index
    %c19 = arith.constant 19 : index
    %384 = memref.load %arg2[%c0_172, %c19] : memref<4x36xf32, #tpu.memory_space<smem>>
    %c0_173 = arith.constant 0 : index
    %c20 = arith.constant 20 : index
    %385 = memref.load %arg2[%c0_173, %c20] : memref<4x36xf32, #tpu.memory_space<smem>>
    %c0_174 = arith.constant 0 : index
    %c21 = arith.constant 21 : index
    %386 = memref.load %arg2[%c0_174, %c21] : memref<4x36xf32, #tpu.memory_space<smem>>
    %c0_175 = arith.constant 0 : index
    %c22 = arith.constant 22 : index
    %387 = memref.load %arg2[%c0_175, %c22] : memref<4x36xf32, #tpu.memory_space<smem>>
    %c0_176 = arith.constant 0 : index
    %c23 = arith.constant 23 : index
    %388 = memref.load %arg2[%c0_176, %c23] : memref<4x36xf32, #tpu.memory_space<smem>>
    %c0_177 = arith.constant 0 : index
    %c24 = arith.constant 24 : index
    %389 = memref.load %arg2[%c0_177, %c24] : memref<4x36xf32, #tpu.memory_space<smem>>
    %c0_178 = arith.constant 0 : index
    %c25 = arith.constant 25 : index
    %390 = memref.load %arg2[%c0_178, %c25] : memref<4x36xf32, #tpu.memory_space<smem>>
    %c0_179 = arith.constant 0 : index
    %c26 = arith.constant 26 : index
    %391 = memref.load %arg2[%c0_179, %c26] : memref<4x36xf32, #tpu.memory_space<smem>>
    %c1_180 = arith.constant 1 : index
    %c18_181 = arith.constant 18 : index
    %392 = memref.load %arg2[%c1_180, %c18_181] : memref<4x36xf32, #tpu.memory_space<smem>>
    %c1_182 = arith.constant 1 : index
    %c19_183 = arith.constant 19 : index
    %393 = memref.load %arg2[%c1_182, %c19_183] : memref<4x36xf32, #tpu.memory_space<smem>>
    %c1_184 = arith.constant 1 : index
    %c20_185 = arith.constant 20 : index
    %394 = memref.load %arg2[%c1_184, %c20_185] : memref<4x36xf32, #tpu.memory_space<smem>>
    %c1_186 = arith.constant 1 : index
    %c21_187 = arith.constant 21 : index
    %395 = memref.load %arg2[%c1_186, %c21_187] : memref<4x36xf32, #tpu.memory_space<smem>>
    %c1_188 = arith.constant 1 : index
    %c22_189 = arith.constant 22 : index
    %396 = memref.load %arg2[%c1_188, %c22_189] : memref<4x36xf32, #tpu.memory_space<smem>>
    %c1_190 = arith.constant 1 : index
    %c23_191 = arith.constant 23 : index
    %397 = memref.load %arg2[%c1_190, %c23_191] : memref<4x36xf32, #tpu.memory_space<smem>>
    %c1_192 = arith.constant 1 : index
    %c24_193 = arith.constant 24 : index
    %398 = memref.load %arg2[%c1_192, %c24_193] : memref<4x36xf32, #tpu.memory_space<smem>>
    %c1_194 = arith.constant 1 : index
    %c25_195 = arith.constant 25 : index
    %399 = memref.load %arg2[%c1_194, %c25_195] : memref<4x36xf32, #tpu.memory_space<smem>>
    %c1_196 = arith.constant 1 : index
    %c26_197 = arith.constant 26 : index
    %400 = memref.load %arg2[%c1_196, %c26_197] : memref<4x36xf32, #tpu.memory_space<smem>>
    %c2_198 = arith.constant 2 : index
    %c18_199 = arith.constant 18 : index
    %401 = memref.load %arg2[%c2_198, %c18_199] : memref<4x36xf32, #tpu.memory_space<smem>>
    %c2_200 = arith.constant 2 : index
    %c19_201 = arith.constant 19 : index
    %402 = memref.load %arg2[%c2_200, %c19_201] : memref<4x36xf32, #tpu.memory_space<smem>>
    %c2_202 = arith.constant 2 : index
    %c20_203 = arith.constant 20 : index
    %403 = memref.load %arg2[%c2_202, %c20_203] : memref<4x36xf32, #tpu.memory_space<smem>>
    %c2_204 = arith.constant 2 : index
    %c21_205 = arith.constant 21 : index
    %404 = memref.load %arg2[%c2_204, %c21_205] : memref<4x36xf32, #tpu.memory_space<smem>>
    %c2_206 = arith.constant 2 : index
    %c22_207 = arith.constant 22 : index
    %405 = memref.load %arg2[%c2_206, %c22_207] : memref<4x36xf32, #tpu.memory_space<smem>>
    %c2_208 = arith.constant 2 : index
    %c23_209 = arith.constant 23 : index
    %406 = memref.load %arg2[%c2_208, %c23_209] : memref<4x36xf32, #tpu.memory_space<smem>>
    %c2_210 = arith.constant 2 : index
    %c24_211 = arith.constant 24 : index
    %407 = memref.load %arg2[%c2_210, %c24_211] : memref<4x36xf32, #tpu.memory_space<smem>>
    %c2_212 = arith.constant 2 : index
    %c25_213 = arith.constant 25 : index
    %408 = memref.load %arg2[%c2_212, %c25_213] : memref<4x36xf32, #tpu.memory_space<smem>>
    %c2_214 = arith.constant 2 : index
    %c26_215 = arith.constant 26 : index
    %409 = memref.load %arg2[%c2_214, %c26_215] : memref<4x36xf32, #tpu.memory_space<smem>>
    %c3_216 = arith.constant 3 : index
    %c18_217 = arith.constant 18 : index
    %410 = memref.load %arg2[%c3_216, %c18_217] : memref<4x36xf32, #tpu.memory_space<smem>>
    %c3_218 = arith.constant 3 : index
    %c19_219 = arith.constant 19 : index
    %411 = memref.load %arg2[%c3_218, %c19_219] : memref<4x36xf32, #tpu.memory_space<smem>>
    %c3_220 = arith.constant 3 : index
    %c20_221 = arith.constant 20 : index
    %412 = memref.load %arg2[%c3_220, %c20_221] : memref<4x36xf32, #tpu.memory_space<smem>>
    %c3_222 = arith.constant 3 : index
    %c21_223 = arith.constant 21 : index
    %413 = memref.load %arg2[%c3_222, %c21_223] : memref<4x36xf32, #tpu.memory_space<smem>>
    %c3_224 = arith.constant 3 : index
    %c22_225 = arith.constant 22 : index
    %414 = memref.load %arg2[%c3_224, %c22_225] : memref<4x36xf32, #tpu.memory_space<smem>>
    %c3_226 = arith.constant 3 : index
    %c23_227 = arith.constant 23 : index
    %415 = memref.load %arg2[%c3_226, %c23_227] : memref<4x36xf32, #tpu.memory_space<smem>>
    %c3_228 = arith.constant 3 : index
    %c24_229 = arith.constant 24 : index
    %416 = memref.load %arg2[%c3_228, %c24_229] : memref<4x36xf32, #tpu.memory_space<smem>>
    %c3_230 = arith.constant 3 : index
    %c25_231 = arith.constant 25 : index
    %417 = memref.load %arg2[%c3_230, %c25_231] : memref<4x36xf32, #tpu.memory_space<smem>>
    %c3_232 = arith.constant 3 : index
    %c26_233 = arith.constant 26 : index
    %418 = memref.load %arg2[%c3_232, %c26_233] : memref<4x36xf32, #tpu.memory_space<smem>>
    %c1_i32_234 = arith.constant 1 : i32
    %419 = tpu.dynamic_rotate %379 by %c1_i32_234 dim 1 : vector<8x128xf32>, i32 -> vector<8x128xf32>
    %cst_235 = arith.constant 0.000000e+00 : f32
    %420 = vector.broadcast %cst_235 : f32 to vector<8x128xf32>
    %421 = arith.select %6, %419, %420 : vector<8x128xi1>, vector<8x128xf32>
    %c127_i32_236 = arith.constant 127 : i32
    %422 = tpu.dynamic_rotate %379 by %c127_i32_236 dim 1 : vector<8x128xf32>, i32 -> vector<8x128xf32>
    %cst_237 = arith.constant 0.000000e+00 : f32
    %423 = vector.broadcast %cst_237 : f32 to vector<8x128xf32>
    %424 = arith.select %8, %422, %423 : vector<8x128xi1>, vector<8x128xf32>
    %425 = vector.broadcast %383 : f32 to vector<8x128xf32>
    %426 = arith.mulf %425, %421 : vector<8x128xf32>
    %427 = arith.addf %359, %426 : vector<8x128xf32>
    %428 = vector.broadcast %392 : f32 to vector<8x128xf32>
    %429 = arith.mulf %428, %421 : vector<8x128xf32>
    %430 = arith.addf %362, %429 : vector<8x128xf32>
    %431 = vector.broadcast %401 : f32 to vector<8x128xf32>
    %432 = arith.mulf %431, %421 : vector<8x128xf32>
    %433 = arith.addf %365, %432 : vector<8x128xf32>
    %434 = vector.broadcast %410 : f32 to vector<8x128xf32>
    %435 = arith.mulf %434, %421 : vector<8x128xf32>
    %436 = arith.addf %368, %435 : vector<8x128xf32>
    %437 = vector.broadcast %384 : f32 to vector<8x128xf32>
    %438 = arith.mulf %437, %379 : vector<8x128xf32>
    %439 = arith.addf %427, %438 : vector<8x128xf32>
    %440 = vector.broadcast %393 : f32 to vector<8x128xf32>
    %441 = arith.mulf %440, %379 : vector<8x128xf32>
    %442 = arith.addf %430, %441 : vector<8x128xf32>
    %443 = vector.broadcast %402 : f32 to vector<8x128xf32>
    %444 = arith.mulf %443, %379 : vector<8x128xf32>
    %445 = arith.addf %433, %444 : vector<8x128xf32>
    %446 = vector.broadcast %411 : f32 to vector<8x128xf32>
    %447 = arith.mulf %446, %379 : vector<8x128xf32>
    %448 = arith.addf %436, %447 : vector<8x128xf32>
    %449 = vector.broadcast %385 : f32 to vector<8x128xf32>
    %450 = arith.mulf %449, %424 : vector<8x128xf32>
    %451 = arith.addf %439, %450 : vector<8x128xf32>
    %452 = vector.broadcast %394 : f32 to vector<8x128xf32>
    %453 = arith.mulf %452, %424 : vector<8x128xf32>
    %454 = arith.addf %442, %453 : vector<8x128xf32>
    %455 = vector.broadcast %403 : f32 to vector<8x128xf32>
    %456 = arith.mulf %455, %424 : vector<8x128xf32>
    %457 = arith.addf %445, %456 : vector<8x128xf32>
    %458 = vector.broadcast %412 : f32 to vector<8x128xf32>
    %459 = arith.mulf %458, %424 : vector<8x128xf32>
    %460 = arith.addf %448, %459 : vector<8x128xf32>
    %c1_i32_238 = arith.constant 1 : i32
    %461 = tpu.dynamic_rotate %372 by %c1_i32_238 dim 1 : vector<8x128xf32>, i32 -> vector<8x128xf32>
    %cst_239 = arith.constant 0.000000e+00 : f32
    %462 = vector.broadcast %cst_239 : f32 to vector<8x128xf32>
    %463 = arith.select %6, %461, %462 : vector<8x128xi1>, vector<8x128xf32>
    %c127_i32_240 = arith.constant 127 : i32
    %464 = tpu.dynamic_rotate %372 by %c127_i32_240 dim 1 : vector<8x128xf32>, i32 -> vector<8x128xf32>
    %cst_241 = arith.constant 0.000000e+00 : f32
    %465 = vector.broadcast %cst_241 : f32 to vector<8x128xf32>
    %466 = arith.select %8, %464, %465 : vector<8x128xi1>, vector<8x128xf32>
    %467 = vector.broadcast %386 : f32 to vector<8x128xf32>
    %468 = arith.mulf %467, %463 : vector<8x128xf32>
    %469 = arith.addf %451, %468 : vector<8x128xf32>
    %470 = vector.broadcast %395 : f32 to vector<8x128xf32>
    %471 = arith.mulf %470, %463 : vector<8x128xf32>
    %472 = arith.addf %454, %471 : vector<8x128xf32>
    %473 = vector.broadcast %404 : f32 to vector<8x128xf32>
    %474 = arith.mulf %473, %463 : vector<8x128xf32>
    %475 = arith.addf %457, %474 : vector<8x128xf32>
    %476 = vector.broadcast %413 : f32 to vector<8x128xf32>
    %477 = arith.mulf %476, %463 : vector<8x128xf32>
    %478 = arith.addf %460, %477 : vector<8x128xf32>
    %479 = vector.broadcast %387 : f32 to vector<8x128xf32>
    %480 = arith.mulf %479, %372 : vector<8x128xf32>
    %481 = arith.addf %469, %480 : vector<8x128xf32>
    %482 = vector.broadcast %396 : f32 to vector<8x128xf32>
    %483 = arith.mulf %482, %372 : vector<8x128xf32>
    %484 = arith.addf %472, %483 : vector<8x128xf32>
    %485 = vector.broadcast %405 : f32 to vector<8x128xf32>
    %486 = arith.mulf %485, %372 : vector<8x128xf32>
    %487 = arith.addf %475, %486 : vector<8x128xf32>
    %488 = vector.broadcast %414 : f32 to vector<8x128xf32>
    %489 = arith.mulf %488, %372 : vector<8x128xf32>
    %490 = arith.addf %478, %489 : vector<8x128xf32>
    %491 = vector.broadcast %388 : f32 to vector<8x128xf32>
    %492 = arith.mulf %491, %466 : vector<8x128xf32>
    %493 = arith.addf %481, %492 : vector<8x128xf32>
    %494 = vector.broadcast %397 : f32 to vector<8x128xf32>
    %495 = arith.mulf %494, %466 : vector<8x128xf32>
    %496 = arith.addf %484, %495 : vector<8x128xf32>
    %497 = vector.broadcast %406 : f32 to vector<8x128xf32>
    %498 = arith.mulf %497, %466 : vector<8x128xf32>
    %499 = arith.addf %487, %498 : vector<8x128xf32>
    %500 = vector.broadcast %415 : f32 to vector<8x128xf32>
    %501 = arith.mulf %500, %466 : vector<8x128xf32>
    %502 = arith.addf %490, %501 : vector<8x128xf32>
    %c1_i32_242 = arith.constant 1 : i32
    %503 = tpu.dynamic_rotate %382 by %c1_i32_242 dim 1 : vector<8x128xf32>, i32 -> vector<8x128xf32>
    %cst_243 = arith.constant 0.000000e+00 : f32
    %504 = vector.broadcast %cst_243 : f32 to vector<8x128xf32>
    %505 = arith.select %6, %503, %504 : vector<8x128xi1>, vector<8x128xf32>
    %c127_i32_244 = arith.constant 127 : i32
    %506 = tpu.dynamic_rotate %382 by %c127_i32_244 dim 1 : vector<8x128xf32>, i32 -> vector<8x128xf32>
    %cst_245 = arith.constant 0.000000e+00 : f32
    %507 = vector.broadcast %cst_245 : f32 to vector<8x128xf32>
    %508 = arith.select %8, %506, %507 : vector<8x128xi1>, vector<8x128xf32>
    %509 = vector.broadcast %389 : f32 to vector<8x128xf32>
    %510 = arith.mulf %509, %505 : vector<8x128xf32>
    %511 = arith.addf %493, %510 : vector<8x128xf32>
    %512 = vector.broadcast %398 : f32 to vector<8x128xf32>
    %513 = arith.mulf %512, %505 : vector<8x128xf32>
    %514 = arith.addf %496, %513 : vector<8x128xf32>
    %515 = vector.broadcast %407 : f32 to vector<8x128xf32>
    %516 = arith.mulf %515, %505 : vector<8x128xf32>
    %517 = arith.addf %499, %516 : vector<8x128xf32>
    %518 = vector.broadcast %416 : f32 to vector<8x128xf32>
    %519 = arith.mulf %518, %505 : vector<8x128xf32>
    %520 = arith.addf %502, %519 : vector<8x128xf32>
    %521 = vector.broadcast %390 : f32 to vector<8x128xf32>
    %522 = arith.mulf %521, %382 : vector<8x128xf32>
    %523 = arith.addf %511, %522 : vector<8x128xf32>
    %524 = vector.broadcast %399 : f32 to vector<8x128xf32>
    %525 = arith.mulf %524, %382 : vector<8x128xf32>
    %526 = arith.addf %514, %525 : vector<8x128xf32>
    %527 = vector.broadcast %408 : f32 to vector<8x128xf32>
    %528 = arith.mulf %527, %382 : vector<8x128xf32>
    %529 = arith.addf %517, %528 : vector<8x128xf32>
    %530 = vector.broadcast %417 : f32 to vector<8x128xf32>
    %531 = arith.mulf %530, %382 : vector<8x128xf32>
    %532 = arith.addf %520, %531 : vector<8x128xf32>
    %533 = vector.broadcast %391 : f32 to vector<8x128xf32>
    %534 = arith.mulf %533, %508 : vector<8x128xf32>
    %535 = arith.addf %523, %534 : vector<8x128xf32>
    %536 = vector.broadcast %400 : f32 to vector<8x128xf32>
    %537 = arith.mulf %536, %508 : vector<8x128xf32>
    %538 = arith.addf %526, %537 : vector<8x128xf32>
    %539 = vector.broadcast %409 : f32 to vector<8x128xf32>
    %540 = arith.mulf %539, %508 : vector<8x128xf32>
    %541 = arith.addf %529, %540 : vector<8x128xf32>
    %542 = vector.broadcast %418 : f32 to vector<8x128xf32>
    %543 = arith.mulf %542, %508 : vector<8x128xf32>
    %544 = arith.addf %532, %543 : vector<8x128xf32>
    %c124_i32 = arith.constant 124 : i32
    %545 = tpu.dynamic_rotate %1 by %c124_i32 dim 2 : vector<4x8x128xf32>, i32 -> vector<4x8x128xf32>
    %546 = arith.subf %1, %545 : vector<4x8x128xf32>
    %547 = math.absf %546 : vector<4x8x128xf32>
    %cst_246 = arith.constant dense<0.000000e+00> : vector<8x128xf32>
    %548 = vector.multi_reduction <add>, %547, %cst_246 [0] : vector<4x8x128xf32> to vector<8x128xf32>
    %c124_i32_247 = arith.constant 124 : i32
    %549 = tpu.dynamic_rotate %3 by %c124_i32_247 dim 2 : vector<4x2x128xf32>, i32 -> vector<4x2x128xf32>
    %550 = arith.subf %3, %549 : vector<4x2x128xf32>
    %551 = math.absf %550 : vector<4x2x128xf32>
    %cst_248 = arith.constant dense<0.000000e+00> : vector<2x128xf32>
    %552 = vector.multi_reduction <add>, %551, %cst_248 [0] : vector<4x2x128xf32> to vector<2x128xf32>
    %553 = vector.extract_strided_slice %552 {offsets = [0, 0], sizes = [1, 128], strides = [1, 1]} : vector<2x128xf32> to vector<1x128xf32>
    %554 = vector.extract_strided_slice %548 {offsets = [0, 0], sizes = [7, 128], strides = [1, 1]} : vector<8x128xf32> to vector<7x128xf32>
    %555 = tpu.concatenate %553, %554 in 0 : vector<1x128xf32>, vector<7x128xf32> -> vector<8x128xf32>
    %556 = vector.extract_strided_slice %548 {offsets = [1, 0], sizes = [7, 128], strides = [1, 1]} : vector<8x128xf32> to vector<7x128xf32>
    %557 = vector.extract_strided_slice %552 {offsets = [1, 0], sizes = [1, 128], strides = [1, 1]} : vector<2x128xf32> to vector<1x128xf32>
    %558 = tpu.concatenate %556, %557 in 0 : vector<7x128xf32>, vector<1x128xf32> -> vector<8x128xf32>
    %c0_249 = arith.constant 0 : index
    %c27 = arith.constant 27 : index
    %559 = memref.load %arg2[%c0_249, %c27] : memref<4x36xf32, #tpu.memory_space<smem>>
    %c0_250 = arith.constant 0 : index
    %c28 = arith.constant 28 : index
    %560 = memref.load %arg2[%c0_250, %c28] : memref<4x36xf32, #tpu.memory_space<smem>>
    %c0_251 = arith.constant 0 : index
    %c29 = arith.constant 29 : index
    %561 = memref.load %arg2[%c0_251, %c29] : memref<4x36xf32, #tpu.memory_space<smem>>
    %c0_252 = arith.constant 0 : index
    %c30 = arith.constant 30 : index
    %562 = memref.load %arg2[%c0_252, %c30] : memref<4x36xf32, #tpu.memory_space<smem>>
    %c0_253 = arith.constant 0 : index
    %c31 = arith.constant 31 : index
    %563 = memref.load %arg2[%c0_253, %c31] : memref<4x36xf32, #tpu.memory_space<smem>>
    %c0_254 = arith.constant 0 : index
    %c32 = arith.constant 32 : index
    %564 = memref.load %arg2[%c0_254, %c32] : memref<4x36xf32, #tpu.memory_space<smem>>
    %c0_255 = arith.constant 0 : index
    %c33 = arith.constant 33 : index
    %565 = memref.load %arg2[%c0_255, %c33] : memref<4x36xf32, #tpu.memory_space<smem>>
    %c0_256 = arith.constant 0 : index
    %c34 = arith.constant 34 : index
    %566 = memref.load %arg2[%c0_256, %c34] : memref<4x36xf32, #tpu.memory_space<smem>>
    %c0_257 = arith.constant 0 : index
    %c35 = arith.constant 35 : index
    %567 = memref.load %arg2[%c0_257, %c35] : memref<4x36xf32, #tpu.memory_space<smem>>
    %c1_258 = arith.constant 1 : index
    %c27_259 = arith.constant 27 : index
    %568 = memref.load %arg2[%c1_258, %c27_259] : memref<4x36xf32, #tpu.memory_space<smem>>
    %c1_260 = arith.constant 1 : index
    %c28_261 = arith.constant 28 : index
    %569 = memref.load %arg2[%c1_260, %c28_261] : memref<4x36xf32, #tpu.memory_space<smem>>
    %c1_262 = arith.constant 1 : index
    %c29_263 = arith.constant 29 : index
    %570 = memref.load %arg2[%c1_262, %c29_263] : memref<4x36xf32, #tpu.memory_space<smem>>
    %c1_264 = arith.constant 1 : index
    %c30_265 = arith.constant 30 : index
    %571 = memref.load %arg2[%c1_264, %c30_265] : memref<4x36xf32, #tpu.memory_space<smem>>
    %c1_266 = arith.constant 1 : index
    %c31_267 = arith.constant 31 : index
    %572 = memref.load %arg2[%c1_266, %c31_267] : memref<4x36xf32, #tpu.memory_space<smem>>
    %c1_268 = arith.constant 1 : index
    %c32_269 = arith.constant 32 : index
    %573 = memref.load %arg2[%c1_268, %c32_269] : memref<4x36xf32, #tpu.memory_space<smem>>
    %c1_270 = arith.constant 1 : index
    %c33_271 = arith.constant 33 : index
    %574 = memref.load %arg2[%c1_270, %c33_271] : memref<4x36xf32, #tpu.memory_space<smem>>
    %c1_272 = arith.constant 1 : index
    %c34_273 = arith.constant 34 : index
    %575 = memref.load %arg2[%c1_272, %c34_273] : memref<4x36xf32, #tpu.memory_space<smem>>
    %c1_274 = arith.constant 1 : index
    %c35_275 = arith.constant 35 : index
    %576 = memref.load %arg2[%c1_274, %c35_275] : memref<4x36xf32, #tpu.memory_space<smem>>
    %c2_276 = arith.constant 2 : index
    %c27_277 = arith.constant 27 : index
    %577 = memref.load %arg2[%c2_276, %c27_277] : memref<4x36xf32, #tpu.memory_space<smem>>
    %c2_278 = arith.constant 2 : index
    %c28_279 = arith.constant 28 : index
    %578 = memref.load %arg2[%c2_278, %c28_279] : memref<4x36xf32, #tpu.memory_space<smem>>
    %c2_280 = arith.constant 2 : index
    %c29_281 = arith.constant 29 : index
    %579 = memref.load %arg2[%c2_280, %c29_281] : memref<4x36xf32, #tpu.memory_space<smem>>
    %c2_282 = arith.constant 2 : index
    %c30_283 = arith.constant 30 : index
    %580 = memref.load %arg2[%c2_282, %c30_283] : memref<4x36xf32, #tpu.memory_space<smem>>
    %c2_284 = arith.constant 2 : index
    %c31_285 = arith.constant 31 : index
    %581 = memref.load %arg2[%c2_284, %c31_285] : memref<4x36xf32, #tpu.memory_space<smem>>
    %c2_286 = arith.constant 2 : index
    %c32_287 = arith.constant 32 : index
    %582 = memref.load %arg2[%c2_286, %c32_287] : memref<4x36xf32, #tpu.memory_space<smem>>
    %c2_288 = arith.constant 2 : index
    %c33_289 = arith.constant 33 : index
    %583 = memref.load %arg2[%c2_288, %c33_289] : memref<4x36xf32, #tpu.memory_space<smem>>
    %c2_290 = arith.constant 2 : index
    %c34_291 = arith.constant 34 : index
    %584 = memref.load %arg2[%c2_290, %c34_291] : memref<4x36xf32, #tpu.memory_space<smem>>
    %c2_292 = arith.constant 2 : index
    %c35_293 = arith.constant 35 : index
    %585 = memref.load %arg2[%c2_292, %c35_293] : memref<4x36xf32, #tpu.memory_space<smem>>
    %c3_294 = arith.constant 3 : index
    %c27_295 = arith.constant 27 : index
    %586 = memref.load %arg2[%c3_294, %c27_295] : memref<4x36xf32, #tpu.memory_space<smem>>
    %c3_296 = arith.constant 3 : index
    %c28_297 = arith.constant 28 : index
    %587 = memref.load %arg2[%c3_296, %c28_297] : memref<4x36xf32, #tpu.memory_space<smem>>
    %c3_298 = arith.constant 3 : index
    %c29_299 = arith.constant 29 : index
    %588 = memref.load %arg2[%c3_298, %c29_299] : memref<4x36xf32, #tpu.memory_space<smem>>
    %c3_300 = arith.constant 3 : index
    %c30_301 = arith.constant 30 : index
    %589 = memref.load %arg2[%c3_300, %c30_301] : memref<4x36xf32, #tpu.memory_space<smem>>
    %c3_302 = arith.constant 3 : index
    %c31_303 = arith.constant 31 : index
    %590 = memref.load %arg2[%c3_302, %c31_303] : memref<4x36xf32, #tpu.memory_space<smem>>
    %c3_304 = arith.constant 3 : index
    %c32_305 = arith.constant 32 : index
    %591 = memref.load %arg2[%c3_304, %c32_305] : memref<4x36xf32, #tpu.memory_space<smem>>
    %c3_306 = arith.constant 3 : index
    %c33_307 = arith.constant 33 : index
    %592 = memref.load %arg2[%c3_306, %c33_307] : memref<4x36xf32, #tpu.memory_space<smem>>
    %c3_308 = arith.constant 3 : index
    %c34_309 = arith.constant 34 : index
    %593 = memref.load %arg2[%c3_308, %c34_309] : memref<4x36xf32, #tpu.memory_space<smem>>
    %c3_310 = arith.constant 3 : index
    %c35_311 = arith.constant 35 : index
    %594 = memref.load %arg2[%c3_310, %c35_311] : memref<4x36xf32, #tpu.memory_space<smem>>
    %c1_i32_312 = arith.constant 1 : i32
    %595 = tpu.dynamic_rotate %555 by %c1_i32_312 dim 1 : vector<8x128xf32>, i32 -> vector<8x128xf32>
    %cst_313 = arith.constant 0.000000e+00 : f32
    %596 = vector.broadcast %cst_313 : f32 to vector<8x128xf32>
    %597 = arith.select %6, %595, %596 : vector<8x128xi1>, vector<8x128xf32>
    %c127_i32_314 = arith.constant 127 : i32
    %598 = tpu.dynamic_rotate %555 by %c127_i32_314 dim 1 : vector<8x128xf32>, i32 -> vector<8x128xf32>
    %cst_315 = arith.constant 0.000000e+00 : f32
    %599 = vector.broadcast %cst_315 : f32 to vector<8x128xf32>
    %600 = arith.select %8, %598, %599 : vector<8x128xi1>, vector<8x128xf32>
    %601 = vector.broadcast %559 : f32 to vector<8x128xf32>
    %602 = arith.mulf %601, %597 : vector<8x128xf32>
    %603 = arith.addf %535, %602 : vector<8x128xf32>
    %604 = vector.broadcast %568 : f32 to vector<8x128xf32>
    %605 = arith.mulf %604, %597 : vector<8x128xf32>
    %606 = arith.addf %538, %605 : vector<8x128xf32>
    %607 = vector.broadcast %577 : f32 to vector<8x128xf32>
    %608 = arith.mulf %607, %597 : vector<8x128xf32>
    %609 = arith.addf %541, %608 : vector<8x128xf32>
    %610 = vector.broadcast %586 : f32 to vector<8x128xf32>
    %611 = arith.mulf %610, %597 : vector<8x128xf32>
    %612 = arith.addf %544, %611 : vector<8x128xf32>
    %613 = vector.broadcast %560 : f32 to vector<8x128xf32>
    %614 = arith.mulf %613, %555 : vector<8x128xf32>
    %615 = arith.addf %603, %614 : vector<8x128xf32>
    %616 = vector.broadcast %569 : f32 to vector<8x128xf32>
    %617 = arith.mulf %616, %555 : vector<8x128xf32>
    %618 = arith.addf %606, %617 : vector<8x128xf32>
    %619 = vector.broadcast %578 : f32 to vector<8x128xf32>
    %620 = arith.mulf %619, %555 : vector<8x128xf32>
    %621 = arith.addf %609, %620 : vector<8x128xf32>
    %622 = vector.broadcast %587 : f32 to vector<8x128xf32>
    %623 = arith.mulf %622, %555 : vector<8x128xf32>
    %624 = arith.addf %612, %623 : vector<8x128xf32>
    %625 = vector.broadcast %561 : f32 to vector<8x128xf32>
    %626 = arith.mulf %625, %600 : vector<8x128xf32>
    %627 = arith.addf %615, %626 : vector<8x128xf32>
    %628 = vector.broadcast %570 : f32 to vector<8x128xf32>
    %629 = arith.mulf %628, %600 : vector<8x128xf32>
    %630 = arith.addf %618, %629 : vector<8x128xf32>
    %631 = vector.broadcast %579 : f32 to vector<8x128xf32>
    %632 = arith.mulf %631, %600 : vector<8x128xf32>
    %633 = arith.addf %621, %632 : vector<8x128xf32>
    %634 = vector.broadcast %588 : f32 to vector<8x128xf32>
    %635 = arith.mulf %634, %600 : vector<8x128xf32>
    %636 = arith.addf %624, %635 : vector<8x128xf32>
    %c1_i32_316 = arith.constant 1 : i32
    %637 = tpu.dynamic_rotate %548 by %c1_i32_316 dim 1 : vector<8x128xf32>, i32 -> vector<8x128xf32>
    %cst_317 = arith.constant 0.000000e+00 : f32
    %638 = vector.broadcast %cst_317 : f32 to vector<8x128xf32>
    %639 = arith.select %6, %637, %638 : vector<8x128xi1>, vector<8x128xf32>
    %c127_i32_318 = arith.constant 127 : i32
    %640 = tpu.dynamic_rotate %548 by %c127_i32_318 dim 1 : vector<8x128xf32>, i32 -> vector<8x128xf32>
    %cst_319 = arith.constant 0.000000e+00 : f32
    %641 = vector.broadcast %cst_319 : f32 to vector<8x128xf32>
    %642 = arith.select %8, %640, %641 : vector<8x128xi1>, vector<8x128xf32>
    %643 = vector.broadcast %562 : f32 to vector<8x128xf32>
    %644 = arith.mulf %643, %639 : vector<8x128xf32>
    %645 = arith.addf %627, %644 : vector<8x128xf32>
    %646 = vector.broadcast %571 : f32 to vector<8x128xf32>
    %647 = arith.mulf %646, %639 : vector<8x128xf32>
    %648 = arith.addf %630, %647 : vector<8x128xf32>
    %649 = vector.broadcast %580 : f32 to vector<8x128xf32>
    %650 = arith.mulf %649, %639 : vector<8x128xf32>
    %651 = arith.addf %633, %650 : vector<8x128xf32>
    %652 = vector.broadcast %589 : f32 to vector<8x128xf32>
    %653 = arith.mulf %652, %639 : vector<8x128xf32>
    %654 = arith.addf %636, %653 : vector<8x128xf32>
    %655 = vector.broadcast %563 : f32 to vector<8x128xf32>
    %656 = arith.mulf %655, %548 : vector<8x128xf32>
    %657 = arith.addf %645, %656 : vector<8x128xf32>
    %658 = vector.broadcast %572 : f32 to vector<8x128xf32>
    %659 = arith.mulf %658, %548 : vector<8x128xf32>
    %660 = arith.addf %648, %659 : vector<8x128xf32>
    %661 = vector.broadcast %581 : f32 to vector<8x128xf32>
    %662 = arith.mulf %661, %548 : vector<8x128xf32>
    %663 = arith.addf %651, %662 : vector<8x128xf32>
    %664 = vector.broadcast %590 : f32 to vector<8x128xf32>
    %665 = arith.mulf %664, %548 : vector<8x128xf32>
    %666 = arith.addf %654, %665 : vector<8x128xf32>
    %667 = vector.broadcast %564 : f32 to vector<8x128xf32>
    %668 = arith.mulf %667, %642 : vector<8x128xf32>
    %669 = arith.addf %657, %668 : vector<8x128xf32>
    %670 = vector.broadcast %573 : f32 to vector<8x128xf32>
    %671 = arith.mulf %670, %642 : vector<8x128xf32>
    %672 = arith.addf %660, %671 : vector<8x128xf32>
    %673 = vector.broadcast %582 : f32 to vector<8x128xf32>
    %674 = arith.mulf %673, %642 : vector<8x128xf32>
    %675 = arith.addf %663, %674 : vector<8x128xf32>
    %676 = vector.broadcast %591 : f32 to vector<8x128xf32>
    %677 = arith.mulf %676, %642 : vector<8x128xf32>
    %678 = arith.addf %666, %677 : vector<8x128xf32>
    %c1_i32_320 = arith.constant 1 : i32
    %679 = tpu.dynamic_rotate %558 by %c1_i32_320 dim 1 : vector<8x128xf32>, i32 -> vector<8x128xf32>
    %cst_321 = arith.constant 0.000000e+00 : f32
    %680 = vector.broadcast %cst_321 : f32 to vector<8x128xf32>
    %681 = arith.select %6, %679, %680 : vector<8x128xi1>, vector<8x128xf32>
    %c127_i32_322 = arith.constant 127 : i32
    %682 = tpu.dynamic_rotate %558 by %c127_i32_322 dim 1 : vector<8x128xf32>, i32 -> vector<8x128xf32>
    %cst_323 = arith.constant 0.000000e+00 : f32
    %683 = vector.broadcast %cst_323 : f32 to vector<8x128xf32>
    %684 = arith.select %8, %682, %683 : vector<8x128xi1>, vector<8x128xf32>
    %685 = vector.broadcast %565 : f32 to vector<8x128xf32>
    %686 = arith.mulf %685, %681 : vector<8x128xf32>
    %687 = arith.addf %669, %686 : vector<8x128xf32>
    %688 = vector.broadcast %574 : f32 to vector<8x128xf32>
    %689 = arith.mulf %688, %681 : vector<8x128xf32>
    %690 = arith.addf %672, %689 : vector<8x128xf32>
    %691 = vector.broadcast %583 : f32 to vector<8x128xf32>
    %692 = arith.mulf %691, %681 : vector<8x128xf32>
    %693 = arith.addf %675, %692 : vector<8x128xf32>
    %694 = vector.broadcast %592 : f32 to vector<8x128xf32>
    %695 = arith.mulf %694, %681 : vector<8x128xf32>
    %696 = arith.addf %678, %695 : vector<8x128xf32>
    %697 = vector.broadcast %566 : f32 to vector<8x128xf32>
    %698 = arith.mulf %697, %558 : vector<8x128xf32>
    %699 = arith.addf %687, %698 : vector<8x128xf32>
    %700 = vector.broadcast %575 : f32 to vector<8x128xf32>
    %701 = arith.mulf %700, %558 : vector<8x128xf32>
    %702 = arith.addf %690, %701 : vector<8x128xf32>
    %703 = vector.broadcast %584 : f32 to vector<8x128xf32>
    %704 = arith.mulf %703, %558 : vector<8x128xf32>
    %705 = arith.addf %693, %704 : vector<8x128xf32>
    %706 = vector.broadcast %593 : f32 to vector<8x128xf32>
    %707 = arith.mulf %706, %558 : vector<8x128xf32>
    %708 = arith.addf %696, %707 : vector<8x128xf32>
    %709 = vector.broadcast %567 : f32 to vector<8x128xf32>
    %710 = arith.mulf %709, %684 : vector<8x128xf32>
    %711 = arith.addf %699, %710 : vector<8x128xf32>
    %712 = vector.broadcast %576 : f32 to vector<8x128xf32>
    %713 = arith.mulf %712, %684 : vector<8x128xf32>
    %714 = arith.addf %702, %713 : vector<8x128xf32>
    %715 = vector.broadcast %585 : f32 to vector<8x128xf32>
    %716 = arith.mulf %715, %684 : vector<8x128xf32>
    %717 = arith.addf %705, %716 : vector<8x128xf32>
    %718 = vector.broadcast %594 : f32 to vector<8x128xf32>
    %719 = arith.mulf %718, %684 : vector<8x128xf32>
    %720 = arith.addf %708, %719 : vector<8x128xf32>
    %c0_324 = arith.constant 0 : index
    %c0_325 = arith.constant 0 : index
    %c0_326 = arith.constant 0 : index
    %c0_327 = arith.constant 0 : index
    %721 = vector.load %arg6[%c0_324, %c0_325, %c0_326, %c0_327] : memref<1x4x8x128xf32, #tpu.memory_space<vmem>>, vector<1x1x8x128xf32>
    %722 = vector.shape_cast %721 : vector<1x1x8x128xf32> to vector<8x128xf32>
    %723 = vector.shape_cast %711 : vector<8x128xf32> to vector<1x1x8x128xf32>
    tpu.vector_store %arg6[%c0_324, %c0_325, %c0_326, %c0_327], %723 {strides = array<i32>} : memref<1x4x8x128xf32, #tpu.memory_space<vmem>>, vector<1x1x8x128xf32>,
    %c0_328 = arith.constant 0 : index
    %c1_329 = arith.constant 1 : index
    %c0_330 = arith.constant 0 : index
    %c0_331 = arith.constant 0 : index
    %724 = vector.load %arg6[%c0_328, %c1_329, %c0_330, %c0_331] : memref<1x4x8x128xf32, #tpu.memory_space<vmem>>, vector<1x1x8x128xf32>
    %725 = vector.shape_cast %724 : vector<1x1x8x128xf32> to vector<8x128xf32>
    %726 = vector.shape_cast %714 : vector<8x128xf32> to vector<1x1x8x128xf32>
    tpu.vector_store %arg6[%c0_328, %c1_329, %c0_330, %c0_331], %726 {strides = array<i32>} : memref<1x4x8x128xf32, #tpu.memory_space<vmem>>, vector<1x1x8x128xf32>,
    %c0_332 = arith.constant 0 : index
    %c2_333 = arith.constant 2 : index
    %c0_334 = arith.constant 0 : index
    %c0_335 = arith.constant 0 : index
    %727 = vector.load %arg6[%c0_332, %c2_333, %c0_334, %c0_335] : memref<1x4x8x128xf32, #tpu.memory_space<vmem>>, vector<1x1x8x128xf32>
    %728 = vector.shape_cast %727 : vector<1x1x8x128xf32> to vector<8x128xf32>
    %729 = vector.shape_cast %717 : vector<8x128xf32> to vector<1x1x8x128xf32>
    tpu.vector_store %arg6[%c0_332, %c2_333, %c0_334, %c0_335], %729 {strides = array<i32>} : memref<1x4x8x128xf32, #tpu.memory_space<vmem>>, vector<1x1x8x128xf32>,
    %c0_336 = arith.constant 0 : index
    %c3_337 = arith.constant 3 : index
    %c0_338 = arith.constant 0 : index
    %c0_339 = arith.constant 0 : index
    %730 = vector.load %arg6[%c0_336, %c3_337, %c0_338, %c0_339] : memref<1x4x8x128xf32, #tpu.memory_space<vmem>>, vector<1x1x8x128xf32>
    %731 = vector.shape_cast %730 : vector<1x1x8x128xf32> to vector<8x128xf32>
    %732 = vector.shape_cast %720 : vector<8x128xf32> to vector<1x1x8x128xf32>
    tpu.vector_store %arg6[%c0_336, %c3_337, %c0_338, %c0_339], %732 {strides = array<i32>} : memref<1x4x8x128xf32, #tpu.memory_space<vmem>>, vector<1x1x8x128xf32>,
    return
  }
  func.func @transform_0(%arg0: i32, %arg1: i32) -> (i32, i32) {
    %c0_i32 = arith.constant 0 : i32
    %c0_i32_0 = arith.constant 0 : i32
    %c0_i32_1 = arith.constant 0 : i32
    return %c0_i32, %c0_i32_0 : i32, i32
  }
  func.func @transform_1(%arg0: i32, %arg1: i32) -> i32 {
    %c0_i32 = arith.constant 0 : i32
    %c0_i32_0 = arith.constant 0 : i32
    return %c0_i32 : i32
  }
  func.func @transform_2(%arg0: i32, %arg1: i32) -> (i32, i32, i32, i32) {
    %c0_i32 = arith.constant 0 : i32
    %c0_i32_0 = arith.constant 0 : i32
    %c0_i32_1 = arith.constant 0 : i32
    return %arg0, %c0_i32, %arg1, %c0_i32_0 : i32, i32, i32, i32
  }
  func.func @transform_3(%arg0: i32, %arg1: i32) -> (i32, i32, i32, i32, i32) {
    %c0_i32 = arith.constant 0 : i32
    %c0_i32_0 = arith.constant 0 : i32
    %c0_i32_1 = arith.constant 0 : i32
    %c0_i32_2 = arith.constant 0 : i32
    return %arg0, %arg1, %c0_i32, %c0_i32_0, %c0_i32_1 : i32, i32, i32, i32, i32
  }
  func.func @transform_4(%arg0: i32, %arg1: i32) -> (i32, i32, i32, i32) {
    %c0_i32 = arith.constant 0 : i32
    %c0_i32_0 = arith.constant 0 : i32
    %c0_i32_1 = arith.constant 0 : i32
    return %arg0, %c0_i32, %arg1, %c0_i32_0 : i32, i32, i32, i32
  }
}

</mosaic_0001>

<llo_original>
// kernel: tpu_custom_call.1
$region0: #{tpu_custom_call.1}
  #allocation0 [shape = 'u32[]', space=smem, size = 0x4, offset = 0x4, fixed_abs, tag = 'smem constant byte address 0x4 - core index']
  #allocation1 [shape = 'u32[72,128]{1,0:T(1,128)}', space=vmem, size = 0x9000, scoped, tag = 'internal scratch']
  %s0 = inlined_call_operand.hbm [shape: f32[4,36], index: 0, kind: input, shape index: {}]
  %s1 = inlined_call_operand.hbm [shape: f32[4], index: 1, kind: input, shape index: {}]
  %s2 = inlined_call_operand.hbm [shape: f32[2,4,16,128], index: 2, kind: input, shape index: {}]
  %s3 = inlined_call_operand.hbm [shape: f32[2,2,4,2,128], index: 3, kind: input, shape index: {}]
  %s4 = inlined_call_operand.hbm [shape: f32[2,4,16,128], index: 4, kind: output, shape index: {}]
  %s5 = sld [smem:[#allocation0]]
  $region65: #{tpu_custom_call.1} parent=0
    _
  %s7 = ssub.s32 1, %s5
  %s8 = scalar_select 0, %s7, %s5
  $region1: #{tpu_custom_call.1} parent=0
    #allocation2 [shape = 'u8[2048]{0}', space=smem, size = 0x800, scoped, tag = 'input window, operand 0, single buffered']
    #allocation3 [shape = 's32[2]{0}', space=sflag, size = 0x8, scoped, tag = 'scoped memory for tpu_custom_call.1']
    #allocation4 [shape = 's32[2]{0}', space=sflag, size = 0x8, scoped, tag = 'scoped memory for tpu_custom_call.1']
    #allocation5 [shape = 's32[2]{0}', space=sflag, size = 0x8, scoped, tag = 'scoped memory for tpu_custom_call.1']
    #allocation6 [shape = 'u8[512]{0}', space=smem, size = 0x200, scoped, tag = 'input window, operand 1, single buffered']
    #allocation7 [shape = 's32[1]{0}', space=sflag, size = 0x4, scoped, tag = 'scoped memory for tpu_custom_call.1']
    #allocation8 [shape = 'u8[32768]{0}', space=vmem, size = 0x8000, scoped, tag = 'input window, operand 2']
    #allocation9 [shape = 'u8[8192]{0}', space=vmem, size = 0x2000, scoped, tag = 'input window, operand 3']
    #allocation10 [shape = 's32[2]{0}', space=sflag, size = 0x8, scoped, tag = 'scoped memory for tpu_custom_call.1']
    #allocation11 [shape = 'u8[32768]{0}', space=vmem, size = 0x8000, scoped, tag = 'output window, operand 0']
    %9 = vsyncpa [#allocation5], 0
    %10 = vsyncpa [#allocation7], 0
    %11 = vsyncpa [#allocation3], 0
    %s12 = scalar_lea.sflag [#allocation3], 1
    %13 = vsyncpa %s12, 0
    %14 = vsyncpa [#allocation10], 0
    %s15 = scalar_lea.sflag [#allocation10], 1
    %16 = vsyncpa %s15, 0
    %17 = vsyncpa [#allocation4], 0
    %s18 = scalar_lea.sflag [#allocation4], 1
    %19 = vsyncpa %s18, 0
    loop: start=0, step=1, limit=6
    $region2: #{tpu_custom_call.1} parent=1 // loop_pre_header
      _
    $region3: #{tpu_custom_call.1} parent=1 // loop_header
      %s21 = sphi 0, %s25
      %p22 = scmp.ge.s32.totalorder %s21, 6
      %s28 = sphi 0, %s40
      %s29 = sphi 0, %s36
      %s30 = sphi 0, %s28
      %s31 = sphi 0, %s29
      %s32 = sphi 0, %s30
      %s33 = sphi 0, %s31
      %s41 = sphi 0, %s41
      %s43 = sphi 0, %s41
      %s44 = sphi 0, %s43
      %s58 = sphi 0, %s44
      %s62 = sphi 0, %s62
      %s64 = sphi 0, %s62
      %s65 = sphi 0, %s64
      %s79 = sphi 0, %s65
      %s87 = sphi 0, %s89
      %s90 = sphi 0, %s87
      %s91 = sphi 0, %s90
      %s107 = sphi 0, %s91
      %s115 = sphi 0, %s117
      %s118 = sphi 0, %s115
      %s119 = sphi 0, %s118
      %s135 = sphi 0, %s119
      %s143 = sphi 0, %s145
      %s146 = sphi 0, %s143
      %s147 = sphi 0, %s146
      %s163 = sphi 0, %s147
    $region4: #{tpu_custom_call.1} parent=1 // loop_header_branch
      %24 = sbr.rel (%p22) target = $region8
    $region5: #{tpu_custom_call.1} parent=1 // loop_body
      %s26 = ssub.s32 %s21, 1
      %s27 = ssub.s32 %s21, 2
      %s34 = sadd.s32 1, %s29
      %p35 = scmp.ge.s32.totalorder %s34, 2
      %s36 = scalar_select %p35, 0, %s34
      %s37 = sadd.s32 1, %s28
      %s38 = scalar_select %p35, %s37, %s28
      %p39 = scmp.ge.s32.totalorder %s38, 2
      %s40 = scalar_select %p39, 0, %s38
      %s42 = sadd.s32 %s41, 1
      %p45 = scmp.eq.s32.totalorder %s21, 3
      %p46 = scmp.ne.s32.totalorder %s41, %s43
      %p47 = scmp.eq.s32.totalorder %s21, 0
      %p48 = por %p46, %p47
      %p49 = scmp.ne.s32.totalorder %s41, %s43
      %p50 = scmp.eq.s32.totalorder %s26, 3
      %p51 = por %p49, %p50
      %p52 = scmp.ne.s32.totalorder %s43, %s44
      %p53 = scmp.eq.s32.totalorder %s26, 0
      %p54 = por %p52, %p53
      %p55 = scmp.ne.s32.totalorder %s43, %s44
      %p56 = scmp.eq.s32.totalorder %s27, 3
      %p57 = por %p55, %p56
      %p59 = scmp.ne.s32.totalorder %s44, %s58
      %p60 = scmp.eq.s32.totalorder %s27, 0
      %p61 = por %p59, %p60
      %s63 = sadd.s32 %s62, 1
      %p66 = scmp.eq.s32.totalorder %s21, 3
      %p67 = scmp.ne.s32.totalorder %s62, %s64
      %p68 = scmp.eq.s32.totalorder %s21, 0
      %p69 = por %p67, %p68
      %p70 = scmp.ne.s32.totalorder %s62, %s64
      %p71 = scmp.eq.s32.totalorder %s26, 3
      %p72 = por %p70, %p71
      %p73 = scmp.ne.s32.totalorder %s64, %s65
      %p74 = scmp.eq.s32.totalorder %s26, 0
      %p75 = por %p73, %p74
      %p76 = scmp.ne.s32.totalorder %s64, %s65
      %p77 = scmp.eq.s32.totalorder %s27, 3
      %p78 = por %p76, %p77
      %p80 = scmp.ne.s32.totalorder %s65, %s79
      %p81 = scmp.eq.s32.totalorder %s27, 0
      %p82 = por %p80, %p81
      %s83 = ssub.s32 %s28, %s40
      %s84 = ssub.s32 %s29, %s36
      %s85 = sor.u32 %s83, %s84
      %p86 = scmp.eq.s32.totalorder %s85, 0
      %s88 = sadd.s32 %s87, 1
      %s89 = scalar_select %p86, %s87, %s88
      %p92 = pneg %p86
      %p93 = scmp.eq.s32.totalorder %s21, 3
      %p94 = por %p92, %p93
      %p95 = scmp.ne.s32.totalorder %s87, %s90
      %p96 = scmp.eq.s32.totalorder %s21, 0
      %p97 = por %p95, %p96
      %p98 = scmp.ne.s32.totalorder %s87, %s90
      %p99 = scmp.eq.s32.totalorder %s26, 3
      %p100 = por %p98, %p99
      %p101 = scmp.ne.s32.totalorder %s90, %s91
      %p102 = scmp.eq.s32.totalorder %s26, 0
      %p103 = por %p101, %p102
      %p104 = scmp.ne.s32.totalorder %s90, %s91
      %p105 = scmp.eq.s32.totalorder %s27, 3
      %p106 = por %p104, %p105
      %p108 = scmp.ne.s32.totalorder %s91, %s107
      %p109 = scmp.eq.s32.totalorder %s27, 0
      %p110 = por %p108, %p109
      %s111 = ssub.s32 %s28, %s40
      %s112 = ssub.s32 %s29, %s36
      %s113 = sor.u32 %s111, %s112
      %p114 = scmp.eq.s32.totalorder %s113, 0
      %s116 = sadd.s32 %s115, 1
      %s117 = scalar_select %p114, %s115, %s116
      %p120 = pneg %p114
      %p121 = scmp.eq.s32.totalorder %s21, 3
      %p122 = por %p120, %p121
      %p123 = scmp.ne.s32.totalorder %s115, %s118
      %p124 = scmp.eq.s32.totalorder %s21, 0
      %p125 = por %p123, %p124
      %p126 = scmp.ne.s32.totalorder %s115, %s118
      %p127 = scmp.eq.s32.totalorder %s26, 3
      %p128 = por %p126, %p127
      %p129 = scmp.ne.s32.totalorder %s118, %s119
      %p130 = scmp.eq.s32.totalorder %s26, 0
      %p131 = por %p129, %p130
      %p132 = scmp.ne.s32.totalorder %s118, %s119
      %p133 = scmp.eq.s32.totalorder %s27, 3
      %p134 = por %p132, %p133
      %p136 = scmp.ne.s32.totalorder %s119, %s135
      %p137 = scmp.eq.s32.totalorder %s27, 0
      %p138 = por %p136, %p137
      %s139 = ssub.s32 %s28, %s40
      %s140 = ssub.s32 %s29, %s36
      %s141 = sor.u32 %s139, %s140
      %p142 = scmp.eq.s32.totalorder %s141, 0
      %s144 = sadd.s32 %s143, 1
      %s145 = scalar_select %p142, %s143, %s144
      %p148 = pneg %p142
      %p149 = scmp.eq.s32.totalorder %s21, 3
      %p150 = por %p148, %p149
      %p151 = scmp.ne.s32.totalorder %s143, %s146
      %p152 = scmp.eq.s32.totalorder %s21, 0
      %p153 = por %p151, %p152
      %p154 = scmp.ne.s32.totalorder %s143, %s146
      %p155 = scmp.eq.s32.totalorder %s26, 3
      %p156 = por %p154, %p155
      %p157 = scmp.ne.s32.totalorder %s146, %s147
      %p158 = scmp.eq.s32.totalorder %s26, 0
      %p159 = por %p157, %p158
      %p160 = scmp.ne.s32.totalorder %s146, %s147
      %p161 = scmp.eq.s32.totalorder %s27, 3
      %p162 = por %p160, %p161
      %p164 = scmp.ne.s32.totalorder %s147, %s163
      %p165 = scmp.eq.s32.totalorder %s27, 0
      %p166 = por %p164, %p165
      %p167 = scmp.le.s32.totalorder 1, %s21
      %p168 = scmp.lt.s32.totalorder %s21, 5
      %p169 = pnand %p167, %p168
      %p170 = pneg %p169
      // Predicated region
      $region9: #{tpu_custom_call.1} parent=5 // pred_check
        _
      $region10: #{tpu_custom_call.1} parent=5 // pred_check_branch
        %172 = sbr.rel (%p169) target = $region12
      $region11: #{tpu_custom_call.1} parent=5 // pred_region
        %s173 = ssub.s32 %s21, 1
        // Predicated region
        $region13: #{tpu_custom_call.1} parent=11 // pred_check
          %p174 = pneg %p54
        $region14: #{tpu_custom_call.1} parent=11 // pred_check_branch
          %176 = sbr.rel (%p174) target = $region16
        $region15: #{tpu_custom_call.1} parent=11 // pred_region
          %178 = vsyncadd [#allocation5], 0
          %s180 = sshll.u32 %s0, 4
          %s181 = int_to_ptr.hbm [resolvable:$true] %s180
          %183 = dma.hbm_to_smem %s181, 64, [#allocation2], [#allocation5]
        $region16: #{tpu_custom_call.1} parent=11 // pred_fallthru
          _
        // Predicated region
        $region17: #{tpu_custom_call.1} parent=11 // pred_check
          %p184 = pneg %p75
        $region18: #{tpu_custom_call.1} parent=11 // pred_check_branch
          %186 = sbr.rel (%p184) target = $region20
        $region19: #{tpu_custom_call.1} parent=11 // pred_region
          %188 = vsyncadd [#allocation7], 0
          %s190 = sshll.u32 %s1, 4
          %s191 = int_to_ptr.hbm [resolvable:$true] %s190
          %193 = dma.hbm_to_smem %s191, 16, [#allocation6], [#allocation7]
        $region20: #{tpu_custom_call.1} parent=11 // pred_fallthru
          _
      $region12: #{tpu_custom_call.1} parent=5 // pred_fallthru
        _
      %p194 = scmp.lt.s32.totalorder %s21, 4
      // Predicated region
      $region21: #{tpu_custom_call.1} parent=5 // pred_check
        %p195 = pneg %p194
      $region22: #{tpu_custom_call.1} parent=5 // pred_check_branch
        %197 = sbr.rel (%p195) target = $region24
      $region23: #{tpu_custom_call.1} parent=5 // pred_region
        // Predicated region
        $region25: #{tpu_custom_call.1} parent=23 // pred_check
          %p198 = pneg %p97
        $region26: #{tpu_custom_call.1} parent=23 // pred_check_branch
          %200 = sbr.rel (%p198) target = $region28
        $region27: #{tpu_custom_call.1} parent=23 // pred_region
          %s201 = sand.u32 %s87, 1
          %s202 = scalar_lea.sflag [#allocation3], %s201
          %s203 = sand.u32 %s87, 1
          %s204 = smul.addr %s203, 32
          %s205 = scalar_lea.vmem [#allocation8], %s204
          %207 = vsyncadd %s202, 0
          %s208 = smul.addr %s28, 8
          %s209 = sadd.s32 %s29, %s208
          %s210 = smul.addr %s209, 8
          %s211 = scalar_lea.hbm %s2, %s210
          %s212 = sshll.u32 %s211, 4
          %s213 = int_to_ptr.hbm [resolvable:$true] %s212
          %s214 = sshll.u32 %s205, 4
          %s215 = int_to_ptr.vmem [resolvable:$true] %s214
          %220 = dma.hbm_to_vmem [thread:$0]  %s213, 512, %s215, %s202, 256, 128, 8
        $region28: #{tpu_custom_call.1} parent=23 // pred_fallthru
          _
        // Predicated region
        $region29: #{tpu_custom_call.1} parent=23 // pred_check
          %p221 = pneg %p125
        $region30: #{tpu_custom_call.1} parent=23 // pred_check_branch
          %223 = sbr.rel (%p221) target = $region32
        $region31: #{tpu_custom_call.1} parent=23 // pred_region
          %s224 = sand.u32 %s115, 1
          %s225 = scalar_lea.sflag [#allocation10], %s224
          %s226 = sand.u32 %s115, 1
          %s227 = smul.addr %s226, 8
          %s228 = scalar_lea.vmem [#allocation9], %s227
          %230 = vsyncadd %s225, 0
          %s231 = smul.addr %s29, 4
          %s232 = smul.addr %s28, 8
          %s233 = sadd.s32 %s231, %s232
          %s234 = smul.addr %s233, 2
          %s235 = scalar_lea.hbm %s3, %s234
          %s236 = sshll.u32 %s235, 4
          %s237 = int_to_ptr.hbm [resolvable:$true] %s236
          %s238 = sshll.u32 %s228, 4
          %s239 = int_to_ptr.vmem [resolvable:$true] %s238
          %244 = dma.hbm_to_vmem [thread:$0]  %s237, 128, %s239, %s225, 32, 32, 2
        $region32: #{tpu_custom_call.1} parent=23 // pred_fallthru
          _
      $region24: #{tpu_custom_call.1} parent=5 // pred_fallthru
        _
      %p245 = scmp.le.s32.totalorder 1, %s21
      %p246 = scmp.lt.s32.totalorder %s21, 5
      %p247 = pnand %p245, %p246
      %p248 = pneg %p247
      // Predicated region
      $region33: #{tpu_custom_call.1} parent=5 // pred_check
        _
      $region34: #{tpu_custom_call.1} parent=5 // pred_check_branch
        %250 = sbr.rel (%p247) target = $region36
      $region35: #{tpu_custom_call.1} parent=5 // pred_region
        %s251 = ssub.s32 %s21, 1
        // Predicated region
        $region37: #{tpu_custom_call.1} parent=35 // pred_check
          %p252 = pneg %p54
        $region38: #{tpu_custom_call.1} parent=35 // pred_check_branch
          %254 = sbr.rel (%p252) target = $region40
        $region39: #{tpu_custom_call.1} parent=35 // pred_region
          %256 = dma.done [#allocation5], 64
        $region40: #{tpu_custom_call.1} parent=35 // pred_fallthru
          _
        // Predicated region
        $region41: #{tpu_custom_call.1} parent=35 // pred_check
          %p257 = pneg %p75
        $region42: #{tpu_custom_call.1} parent=35 // pred_check_branch
          %259 = sbr.rel (%p257) target = $region44
        $region43: #{tpu_custom_call.1} parent=35 // pred_region
          %261 = dma.done [#allocation7], 16
        $region44: #{tpu_custom_call.1} parent=35 // pred_fallthru
          _
        %s262 = sand.u32 %s90, 1
        %s263 = scalar_lea.sflag [#allocation3], %s262
        %s264 = sand.u32 %s90, 1
        %s265 = smul.addr %s264, 32
        %s266 = scalar_lea.vmem [#allocation8], %s265
        // Predicated region
        $region45: #{tpu_custom_call.1} parent=35 // pred_check
          %p267 = pneg %p103
        $region46: #{tpu_custom_call.1} parent=35 // pred_check_branch
          %269 = sbr.rel (%p267) target = $region48
        $region47: #{tpu_custom_call.1} parent=35 // pred_region
          %271 = dma.done %s263, 512
        $region48: #{tpu_custom_call.1} parent=35 // pred_fallthru
          _
        %s272 = sand.u32 %s118, 1
        %s273 = scalar_lea.sflag [#allocation10], %s272
        %s274 = sand.u32 %s118, 1
        %s275 = smul.addr %s274, 8
        %s276 = scalar_lea.vmem [#allocation9], %s275
        // Predicated region
        $region49: #{tpu_custom_call.1} parent=35 // pred_check
          %p277 = pneg %p131
        $region50: #{tpu_custom_call.1} parent=35 // pred_check_branch
          %279 = sbr.rel (%p277) target = $region52
        $region51: #{tpu_custom_call.1} parent=35 // pred_region
          %281 = dma.done %s273, 128
        $region52: #{tpu_custom_call.1} parent=35 // pred_fallthru
          _
        %282 = sfence
        %p283 = pneg %p54
        %p284 = pneg %p51
        %p285 = pneg %p75
        %p286 = pneg %p72
        %s287 = sand.u32 %s90, 1
        %s288 = scalar_lea.sflag [#allocation3], %s287
        %s289 = sand.u32 %s90, 1
        %s290 = smul.addr %s289, 32
        %s291 = scalar_lea.vmem [#allocation8], %s290
        %p292 = pneg %p103
        %p293 = pneg %p100
        %s294 = sand.u32 %s118, 1
        %s295 = scalar_lea.sflag [#allocation10], %s294
        %s296 = sand.u32 %s118, 1
        %s297 = smul.addr %s296, 8
        %s298 = scalar_lea.vmem [#allocation9], %s297
        %p299 = pneg %p131
        %p300 = pneg %p128
        %p301 = pneg %p159
        %p302 = pneg %p156
        %s303 = sand.u32 %s146, 1
        %s304 = scalar_lea.sflag [#allocation4], %s303
        %s305 = sand.u32 %s146, 1
        %s306 = smul.addr %s305, 32
        %s307 = scalar_lea.vmem [#allocation11], %s306
        %v308 = vld [vmem:[%s266] sm:$0xff]
        %v309 = vld [vmem:[%s266 + $0x8] sm:$0xff]
        %v310 = vld [vmem:[%s266 + $0x10] sm:$0xff]
        %v311 = vld [vmem:[%s266 + $0x18] sm:$0xff]
        %v312 = vld [vmem:[%s276] sm:$0x3]
        %v313 = vld [vmem:[%s276 + $0x2] sm:$0x3]
        %v314 = vld [vmem:[%s276 + $0x4] sm:$0x3]
        %v315 = vld [vmem:[%s276 + $0x6] sm:$0x3]
        %v316 = vlaneseq
        %v317 = vand.u32 %v316, 127
        %vm318 = vcmp.gt.s32.totalorder %v317, 0
        %vm319 = vcmp.lt.s32.totalorder %v317, 127
        %s320 = sld [smem:[#allocation6]]
        %v321 = vstv %s320
        %s322 = sld [smem:[#allocation6 + $0x1]]
        %v323 = vstv %s322
        %s324 = sld [smem:[#allocation6 + $0x2]]
        %v325 = vstv %s324
        %s326 = sld [smem:[#allocation6 + $0x3]]
        %v327 = vstv %s326
        %328 = vrot.lane.b32.xlu0 %v308, 127
        %v329 = vpop.permute.xlu0 %328
        %330 = vrot.lane.b32.xlu0 %v309, 127
        %v331 = vpop.permute.xlu0 %330
        %332 = vrot.lane.b32.xlu0 %v310, 127
        %v333 = vpop.permute.xlu0 %332
        %334 = vrot.lane.b32.xlu0 %v311, 127
        %v335 = vpop.permute.xlu0 %334
        %v336 = vsub.f32 %v308, %v329
        %v337 = vsub.f32 %v309, %v331
        %v338 = vsub.f32 %v310, %v333
        %v339 = vsub.f32 %v311, %v335
        %v340 = vand.u32 2147483647, %v336
        %v341 = vand.u32 2147483647, %v337
        %v342 = vand.u32 2147483647, %v338
        %v343 = vand.u32 2147483647, %v339
        %v344 = vadd.f32 %v340, %v341
        %v345 = vadd.f32 %v344, %v342
        %v346 = vadd.f32 %v345, %v343
        %347 = vrot.lane.b32.xlu0 %v312, 127
        %v348 = vpop.permute.xlu0 %347
        %349 = vrot.lane.b32.xlu0 %v313, 127
        %v350 = vpop.permute.xlu0 %349
        %351 = vrot.lane.b32.xlu0 %v314, 127
        %v352 = vpop.permute.xlu0 %351
        %353 = vrot.lane.b32.xlu0 %v315, 127
        %v354 = vpop.permute.xlu0 %353
        %v355 = vsub.f32 %v312, %v348
        %v356 = vsub.f32 %v313, %v350
        %v357 = vsub.f32 %v314, %v352
        %v358 = vsub.f32 %v315, %v354
        %v359 = vand.u32 2147483647, %v355
        %v360 = vand.u32 2147483647, %v356
        %v361 = vand.u32 2147483647, %v357
        %v362 = vand.u32 2147483647, %v358
        %vm363 = vcmask 1041408
        %v364 = vsel %vm363, %v359, 0.0
        %v365 = vsel %vm363, %v360, 0.0
        %v366 = vadd.f32 %v364, %v365
        %v367 = vsel %vm363, %v361, 0.0
        %v368 = vadd.f32 %v366, %v367
        %v369 = vsel %vm363, %v362, 0.0
        %v370 = vadd.f32 %v368, %v369
        %v372 = vrot.slane %v346, 7
        %vm374 = vcmask 1040384
        %v375 = vsel %vm374, %v370, %v372
        %v376 = vrot.slane %v346, 1
        %v379 = vrot.slane %v370, 2
        %vm381 = vcmask 1046528
        %v382 = vsel %vm381, %v376, %v379
        %s383 = sld [smem:[#allocation2]]
        %s384 = sld [smem:[#allocation2 + $0x1]]
        %s385 = sld [smem:[#allocation2 + $0x2]]
        %s386 = sld [smem:[#allocation2 + $0x3]]
        %s387 = sld [smem:[#allocation2 + $0x4]]
        %s388 = sld [smem:[#allocation2 + $0x5]]
        %s389 = sld [smem:[#allocation2 + $0x6]]
        %s390 = sld [smem:[#allocation2 + $0x7]]
        %s391 = sld [smem:[#allocation2 + $0x8]]
        %s392 = sld [smem:[#allocation2 + $0x80]]
        %s393 = sld [smem:[#allocation2 + $0x81]]
        %s394 = sld [smem:[#allocation2 + $0x82]]
        %s395 = sld [smem:[#allocation2 + $0x83]]
        %s396 = sld [smem:[#allocation2 + $0x84]]
        %s397 = sld [smem:[#allocation2 + $0x85]]
        %s398 = sld [smem:[#allocation2 + $0x86]]
        %s399 = sld [smem:[#allocation2 + $0x87]]
        %s400 = sld [smem:[#allocation2 + $0x88]]
        %s401 = sld [smem:[#allocation2 + $0x100]]
        %s402 = sld [smem:[#allocation2 + $0x101]]
        %s403 = sld [smem:[#allocation2 + $0x102]]
        %s404 = sld [smem:[#allocation2 + $0x103]]
        %s405 = sld [smem:[#allocation2 + $0x104]]
        %s406 = sld [smem:[#allocation2 + $0x105]]
        %s407 = sld [smem:[#allocation2 + $0x106]]
        %s408 = sld [smem:[#allocation2 + $0x107]]
        %s409 = sld [smem:[#allocation2 + $0x108]]
        %s410 = sld [smem:[#allocation2 + $0x180]]
        %s411 = sld [smem:[#allocation2 + $0x181]]
        %s412 = sld [smem:[#allocation2 + $0x182]]
        %s413 = sld [smem:[#allocation2 + $0x183]]
        %s414 = sld [smem:[#allocation2 + $0x184]]
        %s415 = sld [smem:[#allocation2 + $0x185]]
        %s416 = sld [smem:[#allocation2 + $0x186]]
        %s417 = sld [smem:[#allocation2 + $0x187]]
        %s418 = sld [smem:[#allocation2 + $0x188]]
        %419 = vrot.lane.b32.xlu0 %v375, 1
        %v420 = vpop.permute.xlu0 %419
        %v421 = vsel %vm318, %v420, 0.0
        %422 = vrot.lane.b32.xlu0 %v375, 127
        %v423 = vpop.permute.xlu0 %422
        %v424 = vsel %vm319, %v423, 0.0
        %v425 = vstv %s383
        %v426 = vmul.f32 %v425, %v421
        %v427 = vadd.f32 %v321, %v426
        %v428 = vstv %s392
        %v429 = vmul.f32 %v428, %v421
        %v430 = vadd.f32 %v323, %v429
        %v431 = vstv %s401
        %v432 = vmul.f32 %v431, %v421
        %v433 = vadd.f32 %v325, %v432
        %v434 = vstv %s410
        %v435 = vmul.f32 %v434, %v421
        %v436 = vadd.f32 %v327, %v435
        %v437 = vstv %s384
        %v438 = vmul.f32 %v437, %v375
        %v439 = vadd.f32 %v427, %v438
        %v440 = vstv %s393
        %v441 = vmul.f32 %v440, %v375
        %v442 = vadd.f32 %v430, %v441
        %v443 = vstv %s402
        %v444 = vmul.f32 %v443, %v375
        %v445 = vadd.f32 %v433, %v444
        %v446 = vstv %s411
        %v447 = vmul.f32 %v446, %v375
        %v448 = vadd.f32 %v436, %v447
        %v449 = vstv %s385
        %v450 = vmul.f32 %v449, %v424
        %v451 = vadd.f32 %v439, %v450
        %v452 = vstv %s394
        %v453 = vmul.f32 %v452, %v424
        %v454 = vadd.f32 %v442, %v453
        %v455 = vstv %s403
        %v456 = vmul.f32 %v455, %v424
        %v457 = vadd.f32 %v445, %v456
        %v458 = vstv %s412
        %v459 = vmul.f32 %v458, %v424
        %v460 = vadd.f32 %v448, %v459
        %461 = vrot.lane.b32.xlu0 %v346, 1
        %v462 = vpop.permute.xlu0 %461
        %v463 = vsel %vm318, %v462, 0.0
        %464 = vrot.lane.b32.xlu0 %v346, 127
        %v465 = vpop.permute.xlu0 %464
        %v466 = vsel %vm319, %v465, 0.0
        %v467 = vstv %s386
        %v468 = vmul.f32 %v467, %v463
        %v469 = vadd.f32 %v451, %v468
        %v470 = vstv %s395
        %v471 = vmul.f32 %v470, %v463
        %v472 = vadd.f32 %v454, %v471
        %v473 = vstv %s404
        %v474 = vmul.f32 %v473, %v463
        %v475 = vadd.f32 %v457, %v474
        %v476 = vstv %s413
        %v477 = vmul.f32 %v476, %v463
        %v478 = vadd.f32 %v460, %v477
        %v479 = vstv %s387
        %v480 = vmul.f32 %v479, %v346
        %v481 = vadd.f32 %v469, %v480
        %v482 = vstv %s396
        %v483 = vmul.f32 %v482, %v346
        %v484 = vadd.f32 %v472, %v483
        %v485 = vstv %s405
        %v486 = vmul.f32 %v485, %v346
        %v487 = vadd.f32 %v475, %v486
        %v488 = vstv %s414
        %v489 = vmul.f32 %v488, %v346
        %v490 = vadd.f32 %v478, %v489
        %v491 = vstv %s388
        %v492 = vmul.f32 %v491, %v466
        %v493 = vadd.f32 %v481, %v492
        %v494 = vstv %s397
        %v495 = vmul.f32 %v494, %v466
        %v496 = vadd.f32 %v484, %v495
        %v497 = vstv %s406
        %v498 = vmul.f32 %v497, %v466
        %v499 = vadd.f32 %v487, %v498
        %v500 = vstv %s415
        %v501 = vmul.f32 %v500, %v466
        %v502 = vadd.f32 %v490, %v501
        %503 = vrot.lane.b32.xlu0 %v382, 1
        %v504 = vpop.permute.xlu0 %503
        %v505 = vsel %vm318, %v504, 0.0
        %506 = vrot.lane.b32.xlu0 %v382, 127
        %v507 = vpop.permute.xlu0 %506
        %v508 = vsel %vm319, %v507, 0.0
        %v509 = vstv %s389
        %v510 = vmul.f32 %v509, %v505
        %v511 = vadd.f32 %v493, %v510
        %v512 = vstv %s398
        %v513 = vmul.f32 %v512, %v505
        %v514 = vadd.f32 %v496, %v513
        %v515 = vstv %s407
        %v516 = vmul.f32 %v515, %v505
        %v517 = vadd.f32 %v499, %v516
        %v518 = vstv %s416
        %v519 = vmul.f32 %v518, %v505
        %v520 = vadd.f32 %v502, %v519
        %v521 = vstv %s390
        %v522 = vmul.f32 %v521, %v382
        %v523 = vadd.f32 %v511, %v522
        %v524 = vstv %s399
        %v525 = vmul.f32 %v524, %v382
        %v526 = vadd.f32 %v514, %v525
        %v527 = vstv %s408
        %v528 = vmul.f32 %v527, %v382
        %v529 = vadd.f32 %v517, %v528
        %v530 = vstv %s417
        %v531 = vmul.f32 %v530, %v382
        %v532 = vadd.f32 %v520, %v531
        %v533 = vstv %s391
        %v534 = vmul.f32 %v533, %v508
        %v535 = vadd.f32 %v523, %v534
        %v536 = vstv %s400
        %v537 = vmul.f32 %v536, %v508
        %v538 = vadd.f32 %v526, %v537
        %v539 = vstv %s409
        %v540 = vmul.f32 %v539, %v508
        %v541 = vadd.f32 %v529, %v540
        %v542 = vstv %s418
        %v543 = vmul.f32 %v542, %v508
        %v544 = vadd.f32 %v532, %v543
        %545 = vrot.lane.b32.xlu0 %v308, 126
        %v546 = vpop.permute.xlu0 %545
        %547 = vrot.lane.b32.xlu0 %v309, 126
        %v548 = vpop.permute.xlu0 %547
        %549 = vrot.lane.b32.xlu0 %v310, 126
        %v550 = vpop.permute.xlu0 %549
        %551 = vrot.lane.b32.xlu0 %v311, 126
        %v552 = vpop.permute.xlu0 %551
        %v553 = vsub.f32 %v308, %v546
        %v554 = vsub.f32 %v309, %v548
        %v555 = vsub.f32 %v310, %v550
        %v556 = vsub.f32 %v311, %v552
        %v557 = vand.u32 2147483647, %v553
        %v558 = vand.u32 2147483647, %v554
        %v559 = vand.u32 2147483647, %v555
        %v560 = vand.u32 2147483647, %v556
        %v561 = vadd.f32 %v557, %v558
        %v562 = vadd.f32 %v561, %v559
        %v563 = vadd.f32 %v562, %v560
        %564 = vrot.lane.b32.xlu0 %v312, 126
        %v565 = vpop.permute.xlu0 %564
        %566 = vrot.lane.b32.xlu0 %v313, 126
        %v567 = vpop.permute.xlu0 %566
        %568 = vrot.lane.b32.xlu0 %v314, 126
        %v569 = vpop.permute.xlu0 %568
        %570 = vrot.lane.b32.xlu0 %v315, 126
        %v571 = vpop.permute.xlu0 %570
        %v572 = vsub.f32 %v312, %v565
        %v573 = vsub.f32 %v313, %v567
        %v574 = vsub.f32 %v314, %v569
        %v575 = vsub.f32 %v315, %v571
        %v576 = vand.u32 2147483647, %v572
        %v577 = vand.u32 2147483647, %v573
        %v578 = vand.u32 2147483647, %v574
        %v579 = vand.u32 2147483647, %v575
        %v580 = vsel %vm363, %v576, 0.0
        %v581 = vsel %vm363, %v577, 0.0
        %v582 = vadd.f32 %v580, %v581
        %v583 = vsel %vm363, %v578, 0.0
        %v584 = vadd.f32 %v582, %v583
        %v585 = vsel %vm363, %v579, 0.0
        %v586 = vadd.f32 %v584, %v585
        %v588 = vrot.slane %v563, 7
        %v590 = vsel %vm374, %v586, %v588
        %v591 = vrot.slane %v563, 1
        %v594 = vrot.slane %v586, 2
        %v596 = vsel %vm381, %v591, %v594
        %s597 = sld [smem:[#allocation2 + $0x9]]
        %s598 = sld [smem:[#allocation2 + $0xa]]
        %s599 = sld [smem:[#allocation2 + $0xb]]
        %s600 = sld [smem:[#allocation2 + $0xc]]
        %s601 = sld [smem:[#allocation2 + $0xd]]
        %s602 = sld [smem:[#allocation2 + $0xe]]
        %s603 = sld [smem:[#allocation2 + $0xf]]
        %s604 = sld [smem:[#allocation2 + $0x10]]
        %s605 = sld [smem:[#allocation2 + $0x11]]
        %s606 = sld [smem:[#allocation2 + $0x89]]
        %s607 = sld [smem:[#allocation2 + $0x8a]]
        %s608 = sld [smem:[#allocation2 + $0x8b]]
        %s609 = sld [smem:[#allocation2 + $0x8c]]
        %s610 = sld [smem:[#allocation2 + $0x8d]]
        %s611 = sld [smem:[#allocation2 + $0x8e]]
        %s612 = sld [smem:[#allocation2 + $0x8f]]
        %s613 = sld [smem:[#allocation2 + $0x90]]
        %s614 = sld [smem:[#allocation2 + $0x91]]
        %s615 = sld [smem:[#allocation2 + $0x109]]
        %s616 = sld [smem:[#allocation2 + $0x10a]]
        %s617 = sld [smem:[#allocation2 + $0x10b]]
        %s618 = sld [smem:[#allocation2 + $0x10c]]
        %s619 = sld [smem:[#allocation2 + $0x10d]]
        %s620 = sld [smem:[#allocation2 + $0x10e]]
        %s621 = sld [smem:[#allocation2 + $0x10f]]
        %s622 = sld [smem:[#allocation2 + $0x110]]
        %s623 = sld [smem:[#allocation2 + $0x111]]
        %s624 = sld [smem:[#allocation2 + $0x189]]
        %s625 = sld [smem:[#allocation2 + $0x18a]]
        %s626 = sld [smem:[#allocation2 + $0x18b]]
        %s627 = sld [smem:[#allocation2 + $0x18c]]
        %s628 = sld [smem:[#allocation2 + $0x18d]]
        %s629 = sld [smem:[#allocation2 + $0x18e]]
        %s630 = sld [smem:[#allocation2 + $0x18f]]
        %s631 = sld [smem:[#allocation2 + $0x190]]
        %s632 = sld [smem:[#allocation2 + $0x191]]
        %633 = vrot.lane.b32.xlu0 %v590, 1
        %v634 = vpop.permute.xlu0 %633
        %v635 = vsel %vm318, %v634, 0.0
        %636 = vrot.lane.b32.xlu0 %v590, 127
        %v637 = vpop.permute.xlu0 %636
        %v638 = vsel %vm319, %v637, 0.0
        %v639 = vstv %s597
        %v640 = vmul.f32 %v639, %v635
        %v641 = vadd.f32 %v535, %v640
        %v642 = vstv %s606
        %v643 = vmul.f32 %v642, %v635
        %v644 = vadd.f32 %v538, %v643
        %v645 = vstv %s615
        %v646 = vmul.f32 %v645, %v635
        %v647 = vadd.f32 %v541, %v646
        %v648 = vstv %s624
        %v649 = vmul.f32 %v648, %v635
        %v650 = vadd.f32 %v544, %v649
        %v651 = vstv %s598
        %v652 = vmul.f32 %v651, %v590
        %v653 = vadd.f32 %v641, %v652
        %v654 = vstv %s607
        %v655 = vmul.f32 %v654, %v590
        %v656 = vadd.f32 %v644, %v655
        %v657 = vstv %s616
        %v658 = vmul.f32 %v657, %v590
        %v659 = vadd.f32 %v647, %v658
        %v660 = vstv %s625
        %v661 = vmul.f32 %v660, %v590
        %v662 = vadd.f32 %v650, %v661
        %v663 = vstv %s599
        %v664 = vmul.f32 %v663, %v638
        %v665 = vadd.f32 %v653, %v664
        %v666 = vstv %s608
        %v667 = vmul.f32 %v666, %v638
        %v668 = vadd.f32 %v656, %v667
        %v669 = vstv %s617
        %v670 = vmul.f32 %v669, %v638
        %v671 = vadd.f32 %v659, %v670
        %v672 = vstv %s626
        %v673 = vmul.f32 %v672, %v638
        %v674 = vadd.f32 %v662, %v673
        %675 = vrot.lane.b32.xlu0 %v563, 1
        %v676 = vpop.permute.xlu0 %675
        %v677 = vsel %vm318, %v676, 0.0
        %678 = vrot.lane.b32.xlu0 %v563, 127
        %v679 = vpop.permute.xlu0 %678
        %v680 = vsel %vm319, %v679, 0.0
        %v681 = vstv %s600
        %v682 = vmul.f32 %v681, %v677
        %v683 = vadd.f32 %v665, %v682
        %v684 = vstv %s609
        %v685 = vmul.f32 %v684, %v677
        %v686 = vadd.f32 %v668, %v685
        %v687 = vstv %s618
        %v688 = vmul.f32 %v687, %v677
        %v689 = vadd.f32 %v671, %v688
        %v690 = vstv %s627
        %v691 = vmul.f32 %v690, %v677
        %v692 = vadd.f32 %v674, %v691
        %v693 = vstv %s601
        %v694 = vmul.f32 %v693, %v563
        %v695 = vadd.f32 %v683, %v694
        %v696 = vstv %s610
        %v697 = vmul.f32 %v696, %v563
        %v698 = vadd.f32 %v686, %v697
        %v699 = vstv %s619
        %v700 = vmul.f32 %v699, %v563
        %v701 = vadd.f32 %v689, %v700
        %v702 = vstv %s628
        %v703 = vmul.f32 %v702, %v563
        %v704 = vadd.f32 %v692, %v703
        %v705 = vstv %s602
        %v706 = vmul.f32 %v705, %v680
        %v707 = vadd.f32 %v695, %v706
        %v708 = vstv %s611
        %v709 = vmul.f32 %v708, %v680
        %v710 = vadd.f32 %v698, %v709
        %v711 = vstv %s620
        %v712 = vmul.f32 %v711, %v680
        %v713 = vadd.f32 %v701, %v712
        %v714 = vstv %s629
        %v715 = vmul.f32 %v714, %v680
        %v716 = vadd.f32 %v704, %v715
        %717 = vrot.lane.b32.xlu0 %v596, 1
        %v718 = vpop.permute.xlu0 %717
        %v719 = vsel %vm318, %v718, 0.0
        %720 = vrot.lane.b32.xlu0 %v596, 127
        %v721 = vpop.permute.xlu0 %720
        %v722 = vsel %vm319, %v721, 0.0
        %v723 = vstv %s603
        %v724 = vmul.f32 %v723, %v719
        %v725 = vadd.f32 %v707, %v724
        %v726 = vstv %s612
        %v727 = vmul.f32 %v726, %v719
        %v728 = vadd.f32 %v710, %v727
        %v729 = vstv %s621
        %v730 = vmul.f32 %v729, %v719
        %v731 = vadd.f32 %v713, %v730
        %v732 = vstv %s630
        %v733 = vmul.f32 %v732, %v719
        %v734 = vadd.f32 %v716, %v733
        %v735 = vstv %s604
        %v736 = vmul.f32 %v735, %v596
        %v737 = vadd.f32 %v725, %v736
        %v738 = vstv %s613
        %v739 = vmul.f32 %v738, %v596
        %v740 = vadd.f32 %v728, %v739
        %v741 = vstv %s622
        %v742 = vmul.f32 %v741, %v596
        %v743 = vadd.f32 %v731, %v742
        %v744 = vstv %s631
        %v745 = vmul.f32 %v744, %v596
        %v746 = vadd.f32 %v734, %v745
        %v747 = vstv %s605
        %v748 = vmul.f32 %v747, %v722
        %v749 = vadd.f32 %v737, %v748
        %v750 = vstv %s614
        %v751 = vmul.f32 %v750, %v722
        %v752 = vadd.f32 %v740, %v751
        %v753 = vstv %s623
        %v754 = vmul.f32 %v753, %v722
        %v755 = vadd.f32 %v743, %v754
        %v756 = vstv %s632
        %v757 = vmul.f32 %v756, %v722
        %v758 = vadd.f32 %v746, %v757
        %759 = vrot.lane.b32.xlu0 %v308, 125
        %v760 = vpop.permute.xlu0 %759
        %761 = vrot.lane.b32.xlu0 %v309, 125
        %v762 = vpop.permute.xlu0 %761
        %763 = vrot.lane.b32.xlu0 %v310, 125
        %v764 = vpop.permute.xlu0 %763
        %765 = vrot.lane.b32.xlu0 %v311, 125
        %v766 = vpop.permute.xlu0 %765
        %v767 = vsub.f32 %v308, %v760
        %v768 = vsub.f32 %v309, %v762
        %v769 = vsub.f32 %v310, %v764
        %v770 = vsub.f32 %v311, %v766
        %v771 = vand.u32 2147483647, %v767
        %v772 = vand.u32 2147483647, %v768
        %v773 = vand.u32 2147483647, %v769
        %v774 = vand.u32 2147483647, %v770
        %v775 = vadd.f32 %v771, %v772
        %v776 = vadd.f32 %v775, %v773
        %v777 = vadd.f32 %v776, %v774
        %778 = vrot.lane.b32.xlu0 %v312, 125
        %v779 = vpop.permute.xlu0 %778
        %780 = vrot.lane.b32.xlu0 %v313, 125
        %v781 = vpop.permute.xlu0 %780
        %782 = vrot.lane.b32.xlu0 %v314, 125
        %v783 = vpop.permute.xlu0 %782
        %784 = vrot.lane.b32.xlu0 %v315, 125
        %v785 = vpop.permute.xlu0 %784
        %v786 = vsub.f32 %v312, %v779
        %v787 = vsub.f32 %v313, %v781
        %v788 = vsub.f32 %v314, %v783
        %v789 = vsub.f32 %v315, %v785
        %v790 = vand.u32 2147483647, %v786
        %v791 = vand.u32 2147483647, %v787
        %v792 = vand.u32 2147483647, %v788
        %v793 = vand.u32 2147483647, %v789
        %v794 = vsel %vm363, %v790, 0.0
        %v795 = vsel %vm363, %v791, 0.0
        %v796 = vadd.f32 %v794, %v795
        %v797 = vsel %vm363, %v792, 0.0
        %v798 = vadd.f32 %v796, %v797
        %v799 = vsel %vm363, %v793, 0.0
        %v800 = vadd.f32 %v798, %v799
        %v802 = vrot.slane %v777, 7
        %v804 = vsel %vm374, %v800, %v802
        %v805 = vrot.slane %v777, 1
        %v808 = vrot.slane %v800, 2
        %v810 = vsel %vm381, %v805, %v808
        %s811 = sld [smem:[#allocation2 + $0x12]]
        %s812 = sld [smem:[#allocation2 + $0x13]]
        %s813 = sld [smem:[#allocation2 + $0x14]]
        %s814 = sld [smem:[#allocation2 + $0x15]]
        %s815 = sld [smem:[#allocation2 + $0x16]]
        %s816 = sld [smem:[#allocation2 + $0x17]]
        %s817 = sld [smem:[#allocation2 + $0x18]]
        %s818 = sld [smem:[#allocation2 + $0x19]]
        %s819 = sld [smem:[#allocation2 + $0x1a]]
        %s820 = sld [smem:[#allocation2 + $0x92]]
        %s821 = sld [smem:[#allocation2 + $0x93]]
        %s822 = sld [smem:[#allocation2 + $0x94]]
        %s823 = sld [smem:[#allocation2 + $0x95]]
        %s824 = sld [smem:[#allocation2 + $0x96]]
        %s825 = sld [smem:[#allocation2 + $0x97]]
        %s826 = sld [smem:[#allocation2 + $0x98]]
        %s827 = sld [smem:[#allocation2 + $0x99]]
        %s828 = sld [smem:[#allocation2 + $0x9a]]
        %s829 = sld [smem:[#allocation2 + $0x112]]
        %s830 = sld [smem:[#allocation2 + $0x113]]
        %s831 = sld [smem:[#allocation2 + $0x114]]
        %s832 = sld [smem:[#allocation2 + $0x115]]
        %s833 = sld [smem:[#allocation2 + $0x116]]
        %s834 = sld [smem:[#allocation2 + $0x117]]
        %s835 = sld [smem:[#allocation2 + $0x118]]
        %s836 = sld [smem:[#allocation2 + $0x119]]
        %s837 = sld [smem:[#allocation2 + $0x11a]]
        %s838 = sld [smem:[#allocation2 + $0x192]]
        %s839 = sld [smem:[#allocation2 + $0x193]]
        %s840 = sld [smem:[#allocation2 + $0x194]]
        %s841 = sld [smem:[#allocation2 + $0x195]]
        %s842 = sld [smem:[#allocation2 + $0x196]]
        %s843 = sld [smem:[#allocation2 + $0x197]]
        %s844 = sld [smem:[#allocation2 + $0x198]]
        %s845 = sld [smem:[#allocation2 + $0x199]]
        %s846 = sld [smem:[#allocation2 + $0x19a]]
        %847 = vrot.lane.b32.xlu0 %v804, 1
        %v848 = vpop.permute.xlu0 %847
        %v849 = vsel %vm318, %v848, 0.0
        %850 = vrot.lane.b32.xlu0 %v804, 127
        %v851 = vpop.permute.xlu0 %850
        %v852 = vsel %vm319, %v851, 0.0
        %v853 = vstv %s811
        %v854 = vmul.f32 %v853, %v849
        %v855 = vadd.f32 %v749, %v854
        %v856 = vstv %s820
        %v857 = vmul.f32 %v856, %v849
        %v858 = vadd.f32 %v752, %v857
        %v859 = vstv %s829
        %v860 = vmul.f32 %v859, %v849
        %v861 = vadd.f32 %v755, %v860
        %v862 = vstv %s838
        %v863 = vmul.f32 %v862, %v849
        %v864 = vadd.f32 %v758, %v863
        %v865 = vstv %s812
        %v866 = vmul.f32 %v865, %v804
        %v867 = vadd.f32 %v855, %v866
        %v868 = vstv %s821
        %v869 = vmul.f32 %v868, %v804
        %v870 = vadd.f32 %v858, %v869
        %v871 = vstv %s830
        %v872 = vmul.f32 %v871, %v804
        %v873 = vadd.f32 %v861, %v872
        %v874 = vstv %s839
        %v875 = vmul.f32 %v874, %v804
        %v876 = vadd.f32 %v864, %v875
        %v877 = vstv %s813
        %v878 = vmul.f32 %v877, %v852
        %v879 = vadd.f32 %v867, %v878
        %v880 = vstv %s822
        %v881 = vmul.f32 %v880, %v852
        %v882 = vadd.f32 %v870, %v881
        %v883 = vstv %s831
        %v884 = vmul.f32 %v883, %v852
        %v885 = vadd.f32 %v873, %v884
        %v886 = vstv %s840
        %v887 = vmul.f32 %v886, %v852
        %v888 = vadd.f32 %v876, %v887
        %889 = vrot.lane.b32.xlu0 %v777, 1
        %v890 = vpop.permute.xlu0 %889
        %v891 = vsel %vm318, %v890, 0.0
        %892 = vrot.lane.b32.xlu0 %v777, 127
        %v893 = vpop.permute.xlu0 %892
        %v894 = vsel %vm319, %v893, 0.0
        %v895 = vstv %s814
        %v896 = vmul.f32 %v895, %v891
        %v897 = vadd.f32 %v879, %v896
        %v898 = vstv %s823
        %v899 = vmul.f32 %v898, %v891
        %v900 = vadd.f32 %v882, %v899
        %v901 = vstv %s832
        %v902 = vmul.f32 %v901, %v891
        %v903 = vadd.f32 %v885, %v902
        %v904 = vstv %s841
        %v905 = vmul.f32 %v904, %v891
        %v906 = vadd.f32 %v888, %v905
        %v907 = vstv %s815
        %v908 = vmul.f32 %v907, %v777
        %v909 = vadd.f32 %v897, %v908
        %v910 = vstv %s824
        %v911 = vmul.f32 %v910, %v777
        %v912 = vadd.f32 %v900, %v911
        %v913 = vstv %s833
        %v914 = vmul.f32 %v913, %v777
        %v915 = vadd.f32 %v903, %v914
        %v916 = vstv %s842
        %v917 = vmul.f32 %v916, %v777
        %v918 = vadd.f32 %v906, %v917
        %v919 = vstv %s816
        %v920 = vmul.f32 %v919, %v894
        %v921 = vadd.f32 %v909, %v920
        %v922 = vstv %s825
        %v923 = vmul.f32 %v922, %v894
        %v924 = vadd.f32 %v912, %v923
        %v925 = vstv %s834
        %v926 = vmul.f32 %v925, %v894
        %v927 = vadd.f32 %v915, %v926
        %v928 = vstv %s843
        %v929 = vmul.f32 %v928, %v894
        %v930 = vadd.f32 %v918, %v929
        %931 = vrot.lane.b32.xlu0 %v810, 1
        %v932 = vpop.permute.xlu0 %931
        %v933 = vsel %vm318, %v932, 0.0
        %934 = vrot.lane.b32.xlu0 %v810, 127
        %v935 = vpop.permute.xlu0 %934
        %v936 = vsel %vm319, %v935, 0.0
        %v937 = vstv %s817
        %v938 = vmul.f32 %v937, %v933
        %v939 = vadd.f32 %v921, %v938
        %v940 = vstv %s826
        %v941 = vmul.f32 %v940, %v933
        %v942 = vadd.f32 %v924, %v941
        %v943 = vstv %s835
        %v944 = vmul.f32 %v943, %v933
        %v945 = vadd.f32 %v927, %v944
        %v946 = vstv %s844
        %v947 = vmul.f32 %v946, %v933
        %v948 = vadd.f32 %v930, %v947
        %v949 = vstv %s818
        %v950 = vmul.f32 %v949, %v810
        %v951 = vadd.f32 %v939, %v950
        %v952 = vstv %s827
        %v953 = vmul.f32 %v952, %v810
        %v954 = vadd.f32 %v942, %v953
        %v955 = vstv %s836
        %v956 = vmul.f32 %v955, %v810
        %v957 = vadd.f32 %v945, %v956
        %v958 = vstv %s845
        %v959 = vmul.f32 %v958, %v810
        %v960 = vadd.f32 %v948, %v959
        %v961 = vstv %s819
        %v962 = vmul.f32 %v961, %v936
        %v963 = vadd.f32 %v951, %v962
        %v964 = vstv %s828
        %v965 = vmul.f32 %v964, %v936
        %v966 = vadd.f32 %v954, %v965
        %v967 = vstv %s837
        %v968 = vmul.f32 %v967, %v936
        %v969 = vadd.f32 %v957, %v968
        %v970 = vstv %s846
        %v971 = vmul.f32 %v970, %v936
        %v972 = vadd.f32 %v960, %v971
        %973 = vrot.lane.b32.xlu0 %v308, 124
        %v974 = vpop.permute.xlu0 %973
        %975 = vrot.lane.b32.xlu0 %v309, 124
        %v976 = vpop.permute.xlu0 %975
        %977 = vrot.lane.b32.xlu0 %v310, 124
        %v978 = vpop.permute.xlu0 %977
        %979 = vrot.lane.b32.xlu0 %v311, 124
        %v980 = vpop.permute.xlu0 %979
        %v981 = vsub.f32 %v308, %v974
        %v982 = vsub.f32 %v309, %v976
        %v983 = vsub.f32 %v310, %v978
        %v984 = vsub.f32 %v311, %v980
        %v985 = vand.u32 2147483647, %v981
        %v986 = vand.u32 2147483647, %v982
        %v987 = vand.u32 2147483647, %v983
        %v988 = vand.u32 2147483647, %v984
        %v989 = vadd.f32 %v985, %v986
        %v990 = vadd.f32 %v989, %v987
        %v991 = vadd.f32 %v990, %v988
        %992 = vrot.lane.b32.xlu0 %v312, 124
        %v993 = vpop.permute.xlu0 %992
        %994 = vrot.lane.b32.xlu0 %v313, 124
        %v995 = vpop.permute.xlu0 %994
        %996 = vrot.lane.b32.xlu0 %v314, 124
        %v997 = vpop.permute.xlu0 %996
        %998 = vrot.lane.b32.xlu0 %v315, 124
        %v999 = vpop.permute.xlu0 %998
        %v1000 = vsub.f32 %v312, %v993
        %v1001 = vsub.f32 %v313, %v995
        %v1002 = vsub.f32 %v314, %v997
        %v1003 = vsub.f32 %v315, %v999
        %v1004 = vand.u32 2147483647, %v1000
        %v1005 = vand.u32 2147483647, %v1001
        %v1006 = vand.u32 2147483647, %v1002
        %v1007 = vand.u32 2147483647, %v1003
        %v1008 = vsel %vm363, %v1004, 0.0
        %v1009 = vsel %vm363, %v1005, 0.0
        %v1010 = vadd.f32 %v1008, %v1009
        %v1011 = vsel %vm363, %v1006, 0.0
        %v1012 = vadd.f32 %v1010, %v1011
        %v1013 = vsel %vm363, %v1007, 0.0
        %v1014 = vadd.f32 %v1012, %v1013
        %v1016 = vrot.slane %v991, 7
        %v1018 = vsel %vm374, %v1014, %v1016
        %v1019 = vrot.slane %v991, 1
        %v1022 = vrot.slane %v1014, 2
        %v1024 = vsel %vm381, %v1019, %v1022
        %s1025 = sld [smem:[#allocation2 + $0x1b]]
        %s1026 = sld [smem:[#allocation2 + $0x1c]]
        %s1027 = sld [smem:[#allocation2 + $0x1d]]
        %s1028 = sld [smem:[#allocation2 + $0x1e]]
        %s1029 = sld [smem:[#allocation2 + $0x1f]]
        %s1030 = sld [smem:[#allocation2 + $0x20]]
        %s1031 = sld [smem:[#allocation2 + $0x21]]
        %s1032 = sld [smem:[#allocation2 + $0x22]]
        %s1033 = sld [smem:[#allocation2 + $0x23]]
        %s1034 = sld [smem:[#allocation2 + $0x9b]]
        %s1035 = sld [smem:[#allocation2 + $0x9c]]
        %s1036 = sld [smem:[#allocation2 + $0x9d]]
        %s1037 = sld [smem:[#allocation2 + $0x9e]]
        %s1038 = sld [smem:[#allocation2 + $0x9f]]
        %s1039 = sld [smem:[#allocation2 + $0xa0]]
        %s1040 = sld [smem:[#allocation2 + $0xa1]]
        %s1041 = sld [smem:[#allocation2 + $0xa2]]
        %s1042 = sld [smem:[#allocation2 + $0xa3]]
        %s1043 = sld [smem:[#allocation2 + $0x11b]]
        %s1044 = sld [smem:[#allocation2 + $0x11c]]
        %s1045 = sld [smem:[#allocation2 + $0x11d]]
        %s1046 = sld [smem:[#allocation2 + $0x11e]]
        %s1047 = sld [smem:[#allocation2 + $0x11f]]
        %s1048 = sld [smem:[#allocation2 + $0x120]]
        %s1049 = sld [smem:[#allocation2 + $0x121]]
        %s1050 = sld [smem:[#allocation2 + $0x122]]
        %s1051 = sld [smem:[#allocation2 + $0x123]]
        %s1052 = sld [smem:[#allocation2 + $0x19b]]
        %s1053 = sld [smem:[#allocation2 + $0x19c]]
        %s1054 = sld [smem:[#allocation2 + $0x19d]]
        %s1055 = sld [smem:[#allocation2 + $0x19e]]
        %s1056 = sld [smem:[#allocation2 + $0x19f]]
        %s1057 = sld [smem:[#allocation2 + $0x1a0]]
        %s1058 = sld [smem:[#allocation2 + $0x1a1]]
        %s1059 = sld [smem:[#allocation2 + $0x1a2]]
        %s1060 = sld [smem:[#allocation2 + $0x1a3]]
        %1061 = vrot.lane.b32.xlu0 %v1018, 1
        %v1062 = vpop.permute.xlu0 %1061
        %v1063 = vsel %vm318, %v1062, 0.0
        %1064 = vrot.lane.b32.xlu0 %v1018, 127
        %v1065 = vpop.permute.xlu0 %1064
        %v1066 = vsel %vm319, %v1065, 0.0
        %v1067 = vstv %s1025
        %v1068 = vmul.f32 %v1067, %v1063
        %v1069 = vadd.f32 %v963, %v1068
        %v1070 = vstv %s1034
        %v1071 = vmul.f32 %v1070, %v1063
        %v1072 = vadd.f32 %v966, %v1071
        %v1073 = vstv %s1043
        %v1074 = vmul.f32 %v1073, %v1063
        %v1075 = vadd.f32 %v969, %v1074
        %v1076 = vstv %s1052
        %v1077 = vmul.f32 %v1076, %v1063
        %v1078 = vadd.f32 %v972, %v1077
        %v1079 = vstv %s1026
        %v1080 = vmul.f32 %v1079, %v1018
        %v1081 = vadd.f32 %v1069, %v1080
        %v1082 = vstv %s1035
        %v1083 = vmul.f32 %v1082, %v1018
        %v1084 = vadd.f32 %v1072, %v1083
        %v1085 = vstv %s1044
        %v1086 = vmul.f32 %v1085, %v1018
        %v1087 = vadd.f32 %v1075, %v1086
        %v1088 = vstv %s1053
        %v1089 = vmul.f32 %v1088, %v1018
        %v1090 = vadd.f32 %v1078, %v1089
        %v1091 = vstv %s1027
        %v1092 = vmul.f32 %v1091, %v1066
        %v1093 = vadd.f32 %v1081, %v1092
        %v1094 = vstv %s1036
        %v1095 = vmul.f32 %v1094, %v1066
        %v1096 = vadd.f32 %v1084, %v1095
        %v1097 = vstv %s1045
        %v1098 = vmul.f32 %v1097, %v1066
        %v1099 = vadd.f32 %v1087, %v1098
        %v1100 = vstv %s1054
        %v1101 = vmul.f32 %v1100, %v1066
        %v1102 = vadd.f32 %v1090, %v1101
        %1103 = vrot.lane.b32.xlu0 %v991, 1
        %v1104 = vpop.permute.xlu0 %1103
        %v1105 = vsel %vm318, %v1104, 0.0
        %1106 = vrot.lane.b32.xlu0 %v991, 127
        %v1107 = vpop.permute.xlu0 %1106
        %v1108 = vsel %vm319, %v1107, 0.0
        %v1109 = vstv %s1028
        %v1110 = vmul.f32 %v1109, %v1105
        %v1111 = vadd.f32 %v1093, %v1110
        %v1112 = vstv %s1037
        %v1113 = vmul.f32 %v1112, %v1105
        %v1114 = vadd.f32 %v1096, %v1113
        %v1115 = vstv %s1046
        %v1116 = vmul.f32 %v1115, %v1105
        %v1117 = vadd.f32 %v1099, %v1116
        %v1118 = vstv %s1055
        %v1119 = vmul.f32 %v1118, %v1105
        %v1120 = vadd.f32 %v1102, %v1119
        %v1121 = vstv %s1029
        %v1122 = vmul.f32 %v1121, %v991
        %v1123 = vadd.f32 %v1111, %v1122
        %v1124 = vstv %s1038
        %v1125 = vmul.f32 %v1124, %v991
        %v1126 = vadd.f32 %v1114, %v1125
        %v1127 = vstv %s1047
        %v1128 = vmul.f32 %v1127, %v991
        %v1129 = vadd.f32 %v1117, %v1128
        %v1130 = vstv %s1056
        %v1131 = vmul.f32 %v1130, %v991
        %v1132 = vadd.f32 %v1120, %v1131
        %v1133 = vstv %s1030
        %v1134 = vmul.f32 %v1133, %v1108
        %v1135 = vadd.f32 %v1123, %v1134
        %v1136 = vstv %s1039
        %v1137 = vmul.f32 %v1136, %v1108
        %v1138 = vadd.f32 %v1126, %v1137
        %v1139 = vstv %s1048
        %v1140 = vmul.f32 %v1139, %v1108
        %v1141 = vadd.f32 %v1129, %v1140
        %v1142 = vstv %s1057
        %v1143 = vmul.f32 %v1142, %v1108
        %v1144 = vadd.f32 %v1132, %v1143
        %1145 = vrot.lane.b32.xlu0 %v1024, 1
        %v1146 = vpop.permute.xlu0 %1145
        %v1147 = vsel %vm318, %v1146, 0.0
        %1148 = vrot.lane.b32.xlu0 %v1024, 127
        %v1149 = vpop.permute.xlu0 %1148
        %v1150 = vsel %vm319, %v1149, 0.0
        %v1151 = vstv %s1031
        %v1152 = vmul.f32 %v1151, %v1147
        %v1153 = vadd.f32 %v1135, %v1152
        %v1154 = vstv %s1040
        %v1155 = vmul.f32 %v1154, %v1147
        %v1156 = vadd.f32 %v1138, %v1155
        %v1157 = vstv %s1049
        %v1158 = vmul.f32 %v1157, %v1147
        %v1159 = vadd.f32 %v1141, %v1158
        %v1160 = vstv %s1058
        %v1161 = vmul.f32 %v1160, %v1147
        %v1162 = vadd.f32 %v1144, %v1161
        %v1163 = vstv %s1032
        %v1164 = vmul.f32 %v1163, %v1024
        %v1165 = vadd.f32 %v1153, %v1164
        %v1166 = vstv %s1041
        %v1167 = vmul.f32 %v1166, %v1024
        %v1168 = vadd.f32 %v1156, %v1167
        %v1169 = vstv %s1050
        %v1170 = vmul.f32 %v1169, %v1024
        %v1171 = vadd.f32 %v1159, %v1170
        %v1172 = vstv %s1059
        %v1173 = vmul.f32 %v1172, %v1024
        %v1174 = vadd.f32 %v1162, %v1173
        %v1175 = vstv %s1033
        %v1176 = vmul.f32 %v1175, %v1150
        %v1177 = vadd.f32 %v1165, %v1176
        %v1178 = vstv %s1042
        %v1179 = vmul.f32 %v1178, %v1150
        %v1180 = vadd.f32 %v1168, %v1179
        %v1181 = vstv %s1051
        %v1182 = vmul.f32 %v1181, %v1150
        %v1183 = vadd.f32 %v1171, %v1182
        %v1184 = vstv %s1060
        %v1185 = vmul.f32 %v1184, %v1150
        %v1186 = vadd.f32 %v1174, %v1185
        %1187 = vst [vmem:[%s307] sm:$0xff] %v1177
        %s1188 = scalar_lea.vmem %s307, 8 [#allocation11]
        %1189 = vst [vmem:[%s1188] sm:$0xff] %v1180
        %s1190 = scalar_lea.vmem %s307, 16 [#allocation11]
        %1191 = vst [vmem:[%s1190] sm:$0xff] %v1183
        %s1192 = scalar_lea.vmem %s307, 24 [#allocation11]
        %1193 = vst [vmem:[%s1192] sm:$0xff] %v1186
        %s1194 = sand.u32 %s146, 1
        %s1195 = scalar_lea.sflag [#allocation4], %s1194
        %s1196 = sand.u32 %s146, 1
        %s1197 = smul.addr %s1196, 32
        %s1198 = scalar_lea.vmem [#allocation11], %s1197
        // Predicated region
        $region53: #{tpu_custom_call.1} parent=35 // pred_check
          %p1199 = pneg %p156
        $region54: #{tpu_custom_call.1} parent=35 // pred_check_branch
          %1201 = sbr.rel (%p1199) target = $region56
        $region55: #{tpu_custom_call.1} parent=35 // pred_region
          %1203 = vsyncadd %s1195, 0
          %s1204 = smul.addr %s30, 8
          %s1205 = sadd.s32 %s31, %s1204
          %s1206 = smul.addr %s1205, 8
          %s1207 = scalar_lea.hbm %s4, %s1206
          %s1208 = sshll.u32 %s1198, 4
          %s1209 = int_to_ptr.vmem [resolvable:$true] %s1208
          %s1210 = sshll.u32 %s1207, 4
          %s1211 = int_to_ptr.hbm [resolvable:$true] %s1210
          %1216 = dma.vmem_to_hbm [thread:$0]  %s1209, 512, %s1211, %s1195, 128, 256, 8
        $region56: #{tpu_custom_call.1} parent=35 // pred_fallthru
          _
      $region36: #{tpu_custom_call.1} parent=5 // pred_fallthru
        _
      %p1217 = scmp.le.s32.totalorder 2, %s21
      // Predicated region
      $region57: #{tpu_custom_call.1} parent=5 // pred_check
        %p1218 = pneg %p1217
      $region58: #{tpu_custom_call.1} parent=5 // pred_check_branch
        %1220 = sbr.rel (%p1218) target = $region60
      $region59: #{tpu_custom_call.1} parent=5 // pred_region
        %s1221 = ssub.s32 %s21, 2
        // Predicated region
        $region61: #{tpu_custom_call.1} parent=59 // pred_check
          %p1222 = pneg %p162
        $region62: #{tpu_custom_call.1} parent=59 // pred_check_branch
          %1224 = sbr.rel (%p1222) target = $region64
        $region63: #{tpu_custom_call.1} parent=59 // pred_region
          %s1225 = sand.u32 %s147, 1
          %s1226 = scalar_lea.sflag [#allocation4], %s1225
          %s1227 = sand.u32 %s147, 1
          %s1228 = smul.addr %s1227, 32
          %s1229 = scalar_lea.vmem [#allocation11], %s1228
          %1231 = dma.done %s1226, 512
        $region64: #{tpu_custom_call.1} parent=59 // pred_fallthru
          _
      $region60: #{tpu_custom_call.1} parent=5 // pred_fallthru
        _
    $region6: #{tpu_custom_call.1} parent=1 // loop_footer
      %s25 = sadd.s32 1, %s21
    $region7: #{tpu_custom_call.1} parent=1 // loop_footer_branch
      %20 = sbr.rel target = $region3
    $region8: #{tpu_custom_call.1} parent=1 // loop_exit
      _
    %1232 = vsyncpa [#allocation3], 1
    %s1233 = scalar_lea.sflag [#allocation3], 1
    %1234 = vsyncpa %s1233, 1
    %1235 = vsyncpa [#allocation10], 1
    %s1236 = scalar_lea.sflag [#allocation10], 1
    %1237 = vsyncpa %s1236, 1
    %1238 = vsyncpa [#allocation4], 1
    %s1239 = scalar_lea.sflag [#allocation4], 1
    %1240 = vsyncpa %s1239, 1
    %1241 = vsyncpa [#allocation5], 1
    %s1242 = scalar_lea.sflag [#allocation5], 1
    %1243 = vsyncpa %s1242, 1
    %1244 = vsyncpa [#allocation7], 1

</llo_original>
